<compile_context>
chip_gen: v7x
topology: tpu7x:2x2x1
jax: 0.10.0
libtpu: 0.0.40
codegen_flags: <defaults>
</compile_context>

<pallas_src>
import jax
import jax.numpy as jnp
from jax import lax
from jax.experimental import pallas as pl
from jax.experimental.pallas import tpu as pltpu


OH, OW, C = 13, 15, 32          # valid spatial / channel dims of v1..w5
WPAD = 16                       # padded output width  (lane-dense)
HPAD = 16                       # padded output height (2 sublane-vregs)
LANES = WPAD * C                # 512 = 4 full vregs per row
XROWS = 24                      # padded space-to-depth input rows (>= 17)


# ----------------------------------------------------------------------------
# Fused kernel
# ----------------------------------------------------------------------------
def _fused_kernel(xs_ref, w_ref, b_ref, o_ref):
    """xs_ref: (4, 24, 512)  space-to-depth input, [2*hp+wp, i, 32*j + o]
       w_ref : (9, 512)      per-output-channel 3x3 taps, tiled across W
       b_ref : (1, 512)      bias, tiled across W
       o_ref : (16, 512)     w5 in the padded (H, W*C) layout
    """
    # Hoisted validity mask: rows < 13 and columns < 15 (lane < 480).
    row_ids = lax.broadcasted_iota(jnp.int32, (HPAD, LANES), 0)
    lane_ids = lax.broadcasted_iota(jnp.int32, (HPAD, LANES), 1)
    valid = (row_ids < OH) & (lane_ids < OW * C)

    bias = b_ref[...]                                        # (1, 512)

    def wrow(kh, kw):                                        # (1, 512)
        k = 3 * kh + kw
        return w_ref[k:k + 1, :]

    # ---- v1 = conv1(x1): grouped 3x3, stride 2, VALID.  The stride is folded
    #      into the parity (space-to-depth) layout; each tap is a contiguous
    #      (16, 512) window read (plus one lane roll for the kw==2 taps).
    def stride2_conv():
        acc = None
        for kh in range(3):
            for kw in range(3):
                p = 2 * (kh % 2) + (kw % 2)
                slab = xs_ref[p, kh // 2: kh // 2 + HPAD, :]      # (16, 512)
                if kw == 2:
                    # column w reads column w+1 of the parity slab
                    slab = pltpu.roll(slab, LANES - C, axis=1)
                term = slab * wrow(kh, kw)
                acc = term if acc is None else acc + term
        return acc + bias

    v1 = stride2_conv()
    # v2..v7 elementwise chain == 24 * relu(v1) (exact algebra); mask keeps the
    # pad row/column at zero so the roll-based SAME convs see correct padding.
    v7 = jnp.where(valid, 24.0 * jnp.maximum(v1, 0.0), 0.0)

    # ---- depthwise 3x3, stride 1, SAME, done as shifted adds in registers.
    def same_conv(cur):
        cm = pltpu.roll(cur, C, axis=1)            # col w <- col w-1 (kw=0)
        cp = pltpu.roll(cur, LANES - C, axis=1)    # col w <- col w+1 (kw=2)

        def rowsum(kh):
            return (cm * wrow(kh, 0)
                    + cur * wrow(kh, 1)
                    + cp * wrow(kh, 2))

        out = pltpu.roll(rowsum(0), 1, axis=0)               # row h <- h-1
        out = out + rowsum(1)
        out = out + pltpu.roll(rowsum(2), HPAD - 1, axis=0)  # row h <- h+1
        return jnp.where(valid, out + bias, 0.0)

    # w5 = v7 + v8 + v9 + v10 + relu(v10), accumulated in registers.
    cur = v7
    w5 = v7
    for _ in range(3):
        cur = same_conv(cur)            # v8, v9, v10 in turn
        w5 = w5 + cur
    w5 = w5 + jnp.maximum(cur, 0.0)     # + relu(v10)

    o_ref[...] = w5                     # single dense, unmasked store
    # (v14, v15, w6..w9 and the cat are dead code and intentionally skipped.)


# ----------------------------------------------------------------------------
# pallas_call wrapper
# ----------------------------------------------------------------------------
def _full_spec(shape):
    n = len(shape)
    return pl.BlockSpec(shape, lambda i, n=n: (0,) * n)


_fused_forward = pl.pallas_call(
    _fused_kernel,
    grid=(1,),
    in_specs=[_full_spec((4, XROWS, LANES)),
              _full_spec((9, LANES)),
              _full_spec((1, LANES))],
    out_specs=_full_spec((HPAD, LANES)),
    out_shape=jax.ShapeDtypeStruct((HPAD, LANES), jnp.float32),
    compiler_params=pltpu.CompilerParams(dimension_semantics=("arbitrary",)),
    cost_estimate=pl.CostEstimate(
        flops=(4 * 9 * 2 + 10) * HPAD * LANES,
        transcendentals=0,
        bytes_accessed=(4 * XROWS * LANES + 9 * LANES + LANES
                        + HPAD * LANES) * 4),
)


@jax.jit
def model_forward(x_nchw, weight_oihw, bias):
    # Space-to-depth + channel-duplication glue (fuses into one XLA copy):
    #   xs[2*hp + wp, i, 32*j + o] = x[0, o // 2, 2*i + hp, 2*j + wp]
    x = x_nchw[0].reshape(16, 14, 2, 16, 2)                  # (c, i, hp, j, wp)
    xs = jnp.transpose(x, (2, 4, 1, 3, 0)).reshape(4, 14, 16, 16)
    xs = jnp.repeat(xs, 2, axis=-1)                          # (4, 14, 16, 32)
    xs = xs.reshape(4, 14, LANES)
    xs = jnp.pad(xs, ((0, 0), (0, XROWS - 14), (0, 0)))      # (4, 24, 512)

    # Weight taps / bias pre-tiled to the flattened (W, C) lane layout.
    w9 = jnp.transpose(weight_oihw[:, 0], (1, 2, 0)).reshape(9, C)  # (9, 32)
    w_flat = jnp.tile(w9, (1, WPAD))                         # (9, 512)
    b_flat = jnp.tile(bias, WPAD).reshape(1, LANES)          # (1, 512)

    w5 = _fused_forward(xs, w_flat, b_flat)                  # (16, 512)
    w5 = w5[:OH, :OW * C].reshape(OH, OW, C)                 # (13, 15, 32)
    return jnp.transpose(w5, (2, 0, 1))[None]                # (1, 32, 13, 15)


# ----------------------------------------------------------------------------
# Pure-JAX reference (same interpretation) for correctness checking
# ----------------------------------------------------------------------------
def ref_forward(x1, weight, bias):
    def conv(x, stride, groups, padding):
        y = lax.conv_general_dilated(
            x, weight, (stride, stride), padding,
            dimension_numbers=("NCHW", "OIHW", "NCHW"),
            feature_group_count=groups,
            precision=lax.Precision.HIGHEST)
        return y + bias[None, :, None, None]

    v1 = conv(x1, 2, 16, "VALID")
    v2 = jax.nn.relu(v1)
    v3 = v2 + v2
    v4 = v3 + v3
    v5 = v2 + v4
    v6 = v2 + v3 + v4 + v2 + v3 + v4 + v5 + v5
    v7 = jax.nn.relu(v6)
    v8 = conv(v7, 1, 32, "SAME")
    v9 = conv(v8, 1, 32, "SAME")
    v10 = conv(v9, 1, 32, "SAME")
    v11 = jax.nn.relu(v10)
    v12 = v7 + v8 + v9
    v13 = v10 + v11
    return v12 + v13


# ----------------------------------------------------------------------------
if __name__ == "__main__":
    key = jax.random.PRNGKey(0)
    kx, kw, kb = jax.random.split(key, 3)

    x1 = jax.random.normal(kx, (1, 16, 28, 32), dtype=jnp.float32)

    # Deterministic Conv2d(16, 32, 3, groups=16) params (PyTorch-style uniform)
    fan_in = 1 * 3 * 3
    bound = 1.0 / (fan_in ** 0.5)
    weight = jax.random.uniform(kw, (32, 1, 3, 3), jnp.float32, -bound, bound)
    bias = jax.random.uniform(kb, (32,), jnp.float32, -bound, bound)

    out = model_forward(x1, weight, bias)
    out = jax.block_until_ready(out)

    assert out.shape == (1, 32, 13, 15), out.shape
    ref = ref_forward(x1, weight, bias)
    assert jnp.allclose(out, ref, rtol=1e-4, atol=2e-3), (
        float(jnp.max(jnp.abs(out - ref))))

    print("KERNEL_OK")
</pallas_src>

<mosaic_0001>
module attributes {stable_mosaic.version = 11 : i64} {
  func.func @_fused_kernel(%arg0: i32, %arg1: memref<4x24x512xf32, #tpu.memory_space<vmem>>, %arg2: memref<9x512xf32, #tpu.memory_space<vmem>>, %arg3: memref<1x512xf32, #tpu.memory_space<vmem>>, %arg4: memref<16x512xf32, #tpu.memory_space<vmem>>) attributes {dimension_semantics = [#tpu.dimension_semantics<arbitrary>], iteration_bounds = array<i64: 1>, scalar_prefetch = 0 : i64, scratch_operands = 0 : i64, tpu.core_type = #tpu.core_type<tc>, window_params = [{pipeline_mode = #tpu.pipeline_mode<synchronous>, transform_indices = @transform_0, window_bounds = array<i64: 4, 24, 512>}, {pipeline_mode = #tpu.pipeline_mode<synchronous>, transform_indices = @transform_1, window_bounds = array<i64: 9, 512>}, {pipeline_mode = #tpu.pipeline_mode<synchronous>, transform_indices = @transform_2, window_bounds = array<i64: 1, 512>}, {pipeline_mode = #tpu.pipeline_mode<synchronous>, transform_indices = @transform_3, window_bounds = array<i64: 16, 512>}]} {
    %0 = tpu.iota {dimensions = array<i32: 0>} : vector<16x512xi32>
    %1 = tpu.iota {dimensions = array<i32: 1>} : vector<16x512xi32>
    %c13_i32 = arith.constant 13 : i32
    %2 = vector.broadcast %c13_i32 : i32 to vector<16x512xi32>
    %3 = arith.cmpi slt, %0, %2 : vector<16x512xi32>
    %c480_i32 = arith.constant 480 : i32
    %4 = vector.broadcast %c480_i32 : i32 to vector<16x512xi32>
    %5 = arith.cmpi slt, %1, %4 : vector<16x512xi32>
    %6 = arith.andi %3, %5 : vector<16x512xi1>
    %c0 = arith.constant 0 : index
    %c0_0 = arith.constant 0 : index
    %7 = vector.load %arg3[%c0, %c0_0] : memref<1x512xf32, #tpu.memory_space<vmem>>, vector<1x512xf32>
    %c0_1 = arith.constant 0 : index
    %c0_2 = arith.constant 0 : index
    %c0_3 = arith.constant 0 : index
    %8 = vector.load %arg1[%c0_1, %c0_2, %c0_3] : memref<4x24x512xf32, #tpu.memory_space<vmem>>, vector<1x16x512xf32>
    %9 = vector.shape_cast %8 : vector<1x16x512xf32> to vector<16x512xf32>
    %c0_4 = arith.constant 0 : index
    %c0_5 = arith.constant 0 : index
    %10 = vector.load %arg2[%c0_4, %c0_5] : memref<9x512xf32, #tpu.memory_space<vmem>>, vector<1x512xf32>
    %11 = vector.broadcast %10 : vector<1x512xf32> to vector<16x512xf32>
    %12 = arith.mulf %9, %11 : vector<16x512xf32>
    %c1 = arith.constant 1 : index
    %c0_6 = arith.constant 0 : index
    %c0_7 = arith.constant 0 : index
    %13 = vector.load %arg1[%c1, %c0_6, %c0_7] : memref<4x24x512xf32, #tpu.memory_space<vmem>>, vector<1x16x512xf32>
    %14 = vector.shape_cast %13 : vector<1x16x512xf32> to vector<16x512xf32>
    %c1_8 = arith.constant 1 : index
    %c0_9 = arith.constant 0 : index
    %15 = vector.load %arg2[%c1_8, %c0_9] : memref<9x512xf32, #tpu.memory_space<vmem>>, vector<1x512xf32>
    %16 = vector.broadcast %15 : vector<1x512xf32> to vector<16x512xf32>
    %17 = arith.mulf %14, %16 : vector<16x512xf32>
    %18 = arith.addf %12, %17 : vector<16x512xf32>
    %c0_10 = arith.constant 0 : index
    %c0_11 = arith.constant 0 : index
    %c0_12 = arith.constant 0 : index
    %19 = vector.load %arg1[%c0_10, %c0_11, %c0_12] : memref<4x24x512xf32, #tpu.memory_space<vmem>>, vector<1x16x512xf32>
    %20 = vector.shape_cast %19 : vector<1x16x512xf32> to vector<16x512xf32>
    %c480_i32_13 = arith.constant 480 : i32
    %21 = tpu.dynamic_rotate %20 by %c480_i32_13 dim 1 : vector<16x512xf32>, i32 -> vector<16x512xf32>
    %c2 = arith.constant 2 : index
    %c0_14 = arith.constant 0 : index
    %22 = vector.load %arg2[%c2, %c0_14] : memref<9x512xf32, #tpu.memory_space<vmem>>, vector<1x512xf32>
    %23 = vector.broadcast %22 : vector<1x512xf32> to vector<16x512xf32>
    %24 = arith.mulf %21, %23 : vector<16x512xf32>
    %25 = arith.addf %18, %24 : vector<16x512xf32>
    %c2_15 = arith.constant 2 : index
    %c0_16 = arith.constant 0 : index
    %c0_17 = arith.constant 0 : index
    %26 = vector.load %arg1[%c2_15, %c0_16, %c0_17] : memref<4x24x512xf32, #tpu.memory_space<vmem>>, vector<1x16x512xf32>
    %27 = vector.shape_cast %26 : vector<1x16x512xf32> to vector<16x512xf32>
    %c3 = arith.constant 3 : index
    %c0_18 = arith.constant 0 : index
    %28 = vector.load %arg2[%c3, %c0_18] : memref<9x512xf32, #tpu.memory_space<vmem>>, vector<1x512xf32>
    %29 = vector.broadcast %28 : vector<1x512xf32> to vector<16x512xf32>
    %30 = arith.mulf %27, %29 : vector<16x512xf32>
    %31 = arith.addf %25, %30 : vector<16x512xf32>
    %c3_19 = arith.constant 3 : index
    %c0_20 = arith.constant 0 : index
    %c0_21 = arith.constant 0 : index
    %32 = vector.load %arg1[%c3_19, %c0_20, %c0_21] : memref<4x24x512xf32, #tpu.memory_space<vmem>>, vector<1x16x512xf32>
    %33 = vector.shape_cast %32 : vector<1x16x512xf32> to vector<16x512xf32>
    %c4 = arith.constant 4 : index
    %c0_22 = arith.constant 0 : index
    %34 = vector.load %arg2[%c4, %c0_22] : memref<9x512xf32, #tpu.memory_space<vmem>>, vector<1x512xf32>
    %35 = vector.broadcast %34 : vector<1x512xf32> to vector<16x512xf32>
    %36 = arith.mulf %33, %35 : vector<16x512xf32>
    %37 = arith.addf %31, %36 : vector<16x512xf32>
    %c2_23 = arith.constant 2 : index
    %c0_24 = arith.constant 0 : index
    %c0_25 = arith.constant 0 : index
    %38 = vector.load %arg1[%c2_23, %c0_24, %c0_25] : memref<4x24x512xf32, #tpu.memory_space<vmem>>, vector<1x16x512xf32>
    %39 = vector.shape_cast %38 : vector<1x16x512xf32> to vector<16x512xf32>
    %c480_i32_26 = arith.constant 480 : i32
    %40 = tpu.dynamic_rotate %39 by %c480_i32_26 dim 1 : vector<16x512xf32>, i32 -> vector<16x512xf32>
    %c5 = arith.constant 5 : index
    %c0_27 = arith.constant 0 : index
    %41 = vector.load %arg2[%c5, %c0_27] : memref<9x512xf32, #tpu.memory_space<vmem>>, vector<1x512xf32>
    %42 = vector.broadcast %41 : vector<1x512xf32> to vector<16x512xf32>
    %43 = arith.mulf %40, %42 : vector<16x512xf32>
    %44 = arith.addf %37, %43 : vector<16x512xf32>
    %c0_28 = arith.constant 0 : index
    %c1_29 = arith.constant 1 : index
    %c0_30 = arith.constant 0 : index
    %45 = vector.load %arg1[%c0_28, %c1_29, %c0_30] : memref<4x24x512xf32, #tpu.memory_space<vmem>>, vector<1x16x512xf32>
    %46 = vector.shape_cast %45 : vector<1x16x512xf32> to vector<16x512xf32>
    %c6 = arith.constant 6 : index
    %c0_31 = arith.constant 0 : index
    %47 = vector.load %arg2[%c6, %c0_31] : memref<9x512xf32, #tpu.memory_space<vmem>>, vector<1x512xf32>
    %48 = vector.broadcast %47 : vector<1x512xf32> to vector<16x512xf32>
    %49 = arith.mulf %46, %48 : vector<16x512xf32>
    %50 = arith.addf %44, %49 : vector<16x512xf32>
    %c1_32 = arith.constant 1 : index
    %c1_33 = arith.constant 1 : index
    %c0_34 = arith.constant 0 : index
    %51 = vector.load %arg1[%c1_32, %c1_33, %c0_34] : memref<4x24x512xf32, #tpu.memory_space<vmem>>, vector<1x16x512xf32>
    %52 = vector.shape_cast %51 : vector<1x16x512xf32> to vector<16x512xf32>
    %c7 = arith.constant 7 : index
    %c0_35 = arith.constant 0 : index
    %53 = vector.load %arg2[%c7, %c0_35] : memref<9x512xf32, #tpu.memory_space<vmem>>, vector<1x512xf32>
    %54 = vector.broadcast %53 : vector<1x512xf32> to vector<16x512xf32>
    %55 = arith.mulf %52, %54 : vector<16x512xf32>
    %56 = arith.addf %50, %55 : vector<16x512xf32>
    %c0_36 = arith.constant 0 : index
    %c1_37 = arith.constant 1 : index
    %c0_38 = arith.constant 0 : index
    %57 = vector.load %arg1[%c0_36, %c1_37, %c0_38] : memref<4x24x512xf32, #tpu.memory_space<vmem>>, vector<1x16x512xf32>
    %58 = vector.shape_cast %57 : vector<1x16x512xf32> to vector<16x512xf32>
    %c480_i32_39 = arith.constant 480 : i32
    %59 = tpu.dynamic_rotate %58 by %c480_i32_39 dim 1 : vector<16x512xf32>, i32 -> vector<16x512xf32>
    %c8 = arith.constant 8 : index
    %c0_40 = arith.constant 0 : index
    %60 = vector.load %arg2[%c8, %c0_40] : memref<9x512xf32, #tpu.memory_space<vmem>>, vector<1x512xf32>
    %61 = vector.broadcast %60 : vector<1x512xf32> to vector<16x512xf32>
    %62 = arith.mulf %59, %61 : vector<16x512xf32>
    %63 = arith.addf %56, %62 : vector<16x512xf32>
    %64 = vector.broadcast %7 : vector<1x512xf32> to vector<16x512xf32>
    %65 = arith.addf %63, %64 : vector<16x512xf32>
    %cst = arith.constant 0.000000e+00 : f32
    %66 = vector.broadcast %cst : f32 to vector<16x512xf32>
    %67 = arith.maximumf %65, %66 : vector<16x512xf32>
    %cst_41 = arith.constant 2.400000e+01 : f32
    %68 = vector.broadcast %cst_41 : f32 to vector<16x512xf32>
    %69 = arith.mulf %68, %67 : vector<16x512xf32>
    %cst_42 = arith.constant 0.000000e+00 : f32
    %70 = vector.broadcast %cst_42 : f32 to vector<16x512xf32>
    %71 = arith.select %6, %69, %70 : vector<16x512xi1>, vector<16x512xf32>
    %c32_i32 = arith.constant 32 : i32
    %72 = tpu.dynamic_rotate %71 by %c32_i32 dim 1 : vector<16x512xf32>, i32 -> vector<16x512xf32>
    %c480_i32_43 = arith.constant 480 : i32
    %73 = tpu.dynamic_rotate %71 by %c480_i32_43 dim 1 : vector<16x512xf32>, i32 -> vector<16x512xf32>
    %c0_44 = arith.constant 0 : index
    %c0_45 = arith.constant 0 : index
    %74 = vector.load %arg2[%c0_44, %c0_45] : memref<9x512xf32, #tpu.memory_space<vmem>>, vector<1x512xf32>
    %75 = vector.broadcast %74 : vector<1x512xf32> to vector<16x512xf32>
    %76 = arith.mulf %72, %75 : vector<16x512xf32>
    %c1_46 = arith.constant 1 : index
    %c0_47 = arith.constant 0 : index
    %77 = vector.load %arg2[%c1_46, %c0_47] : memref<9x512xf32, #tpu.memory_space<vmem>>, vector<1x512xf32>
    %78 = vector.broadcast %77 : vector<1x512xf32> to vector<16x512xf32>
    %79 = arith.mulf %71, %78 : vector<16x512xf32>
    %80 = arith.addf %76, %79 : vector<16x512xf32>
    %c2_48 = arith.constant 2 : index
    %c0_49 = arith.constant 0 : index
    %81 = vector.load %arg2[%c2_48, %c0_49] : memref<9x512xf32, #tpu.memory_space<vmem>>, vector<1x512xf32>
    %82 = vector.broadcast %81 : vector<1x512xf32> to vector<16x512xf32>
    %83 = arith.mulf %73, %82 : vector<16x512xf32>
    %84 = arith.addf %80, %83 : vector<16x512xf32>
    %c1_i32 = arith.constant 1 : i32
    %85 = tpu.dynamic_rotate %84 by %c1_i32 dim 0 : vector<16x512xf32>, i32 -> vector<16x512xf32>
    %c3_50 = arith.constant 3 : index
    %c0_51 = arith.constant 0 : index
    %86 = vector.load %arg2[%c3_50, %c0_51] : memref<9x512xf32, #tpu.memory_space<vmem>>, vector<1x512xf32>
    %87 = vector.broadcast %86 : vector<1x512xf32> to vector<16x512xf32>
    %88 = arith.mulf %72, %87 : vector<16x512xf32>
    %c4_52 = arith.constant 4 : index
    %c0_53 = arith.constant 0 : index
    %89 = vector.load %arg2[%c4_52, %c0_53] : memref<9x512xf32, #tpu.memory_space<vmem>>, vector<1x512xf32>
    %90 = vector.broadcast %89 : vector<1x512xf32> to vector<16x512xf32>
    %91 = arith.mulf %71, %90 : vector<16x512xf32>
    %92 = arith.addf %88, %91 : vector<16x512xf32>
    %c5_54 = arith.constant 5 : index
    %c0_55 = arith.constant 0 : index
    %93 = vector.load %arg2[%c5_54, %c0_55] : memref<9x512xf32, #tpu.memory_space<vmem>>, vector<1x512xf32>
    %94 = vector.broadcast %93 : vector<1x512xf32> to vector<16x512xf32>
    %95 = arith.mulf %73, %94 : vector<16x512xf32>
    %96 = arith.addf %92, %95 : vector<16x512xf32>
    %97 = arith.addf %85, %96 : vector<16x512xf32>
    %c6_56 = arith.constant 6 : index
    %c0_57 = arith.constant 0 : index
    %98 = vector.load %arg2[%c6_56, %c0_57] : memref<9x512xf32, #tpu.memory_space<vmem>>, vector<1x512xf32>
    %99 = vector.broadcast %98 : vector<1x512xf32> to vector<16x512xf32>
    %100 = arith.mulf %72, %99 : vector<16x512xf32>
    %c7_58 = arith.constant 7 : index
    %c0_59 = arith.constant 0 : index
    %101 = vector.load %arg2[%c7_58, %c0_59] : memref<9x512xf32, #tpu.memory_space<vmem>>, vector<1x512xf32>
    %102 = vector.broadcast %101 : vector<1x512xf32> to vector<16x512xf32>
    %103 = arith.mulf %71, %102 : vector<16x512xf32>
    %104 = arith.addf %100, %103 : vector<16x512xf32>
    %c8_60 = arith.constant 8 : index
    %c0_61 = arith.constant 0 : index
    %105 = vector.load %arg2[%c8_60, %c0_61] : memref<9x512xf32, #tpu.memory_space<vmem>>, vector<1x512xf32>
    %106 = vector.broadcast %105 : vector<1x512xf32> to vector<16x512xf32>
    %107 = arith.mulf %73, %106 : vector<16x512xf32>
    %108 = arith.addf %104, %107 : vector<16x512xf32>
    %c15_i32 = arith.constant 15 : i32
    %109 = tpu.dynamic_rotate %108 by %c15_i32 dim 0 : vector<16x512xf32>, i32 -> vector<16x512xf32>
    %110 = arith.addf %97, %109 : vector<16x512xf32>
    %111 = vector.broadcast %7 : vector<1x512xf32> to vector<16x512xf32>
    %112 = arith.addf %110, %111 : vector<16x512xf32>
    %cst_62 = arith.constant 0.000000e+00 : f32
    %113 = vector.broadcast %cst_62 : f32 to vector<16x512xf32>
    %114 = arith.select %6, %112, %113 : vector<16x512xi1>, vector<16x512xf32>
    %115 = arith.addf %71, %114 : vector<16x512xf32>
    %c32_i32_63 = arith.constant 32 : i32
    %116 = tpu.dynamic_rotate %114 by %c32_i32_63 dim 1 : vector<16x512xf32>, i32 -> vector<16x512xf32>
    %c480_i32_64 = arith.constant 480 : i32
    %117 = tpu.dynamic_rotate %114 by %c480_i32_64 dim 1 : vector<16x512xf32>, i32 -> vector<16x512xf32>
    %c0_65 = arith.constant 0 : index
    %c0_66 = arith.constant 0 : index
    %118 = vector.load %arg2[%c0_65, %c0_66] : memref<9x512xf32, #tpu.memory_space<vmem>>, vector<1x512xf32>
    %119 = vector.broadcast %118 : vector<1x512xf32> to vector<16x512xf32>
    %120 = arith.mulf %116, %119 : vector<16x512xf32>
    %c1_67 = arith.constant 1 : index
    %c0_68 = arith.constant 0 : index
    %121 = vector.load %arg2[%c1_67, %c0_68] : memref<9x512xf32, #tpu.memory_space<vmem>>, vector<1x512xf32>
    %122 = vector.broadcast %121 : vector<1x512xf32> to vector<16x512xf32>
    %123 = arith.mulf %114, %122 : vector<16x512xf32>
    %124 = arith.addf %120, %123 : vector<16x512xf32>
    %c2_69 = arith.constant 2 : index
    %c0_70 = arith.constant 0 : index
    %125 = vector.load %arg2[%c2_69, %c0_70] : memref<9x512xf32, #tpu.memory_space<vmem>>, vector<1x512xf32>
    %126 = vector.broadcast %125 : vector<1x512xf32> to vector<16x512xf32>
    %127 = arith.mulf %117, %126 : vector<16x512xf32>
    %128 = arith.addf %124, %127 : vector<16x512xf32>
    %c1_i32_71 = arith.constant 1 : i32
    %129 = tpu.dynamic_rotate %128 by %c1_i32_71 dim 0 : vector<16x512xf32>, i32 -> vector<16x512xf32>
    %c3_72 = arith.constant 3 : index
    %c0_73 = arith.constant 0 : index
    %130 = vector.load %arg2[%c3_72, %c0_73] : memref<9x512xf32, #tpu.memory_space<vmem>>, vector<1x512xf32>
    %131 = vector.broadcast %130 : vector<1x512xf32> to vector<16x512xf32>
    %132 = arith.mulf %116, %131 : vector<16x512xf32>
    %c4_74 = arith.constant 4 : index
    %c0_75 = arith.constant 0 : index
    %133 = vector.load %arg2[%c4_74, %c0_75] : memref<9x512xf32, #tpu.memory_space<vmem>>, vector<1x512xf32>
    %134 = vector.broadcast %133 : vector<1x512xf32> to vector<16x512xf32>
    %135 = arith.mulf %114, %134 : vector<16x512xf32>
    %136 = arith.addf %132, %135 : vector<16x512xf32>
    %c5_76 = arith.constant 5 : index
    %c0_77 = arith.constant 0 : index
    %137 = vector.load %arg2[%c5_76, %c0_77] : memref<9x512xf32, #tpu.memory_space<vmem>>, vector<1x512xf32>
    %138 = vector.broadcast %137 : vector<1x512xf32> to vector<16x512xf32>
    %139 = arith.mulf %117, %138 : vector<16x512xf32>
    %140 = arith.addf %136, %139 : vector<16x512xf32>
    %141 = arith.addf %129, %140 : vector<16x512xf32>
    %c6_78 = arith.constant 6 : index
    %c0_79 = arith.constant 0 : index
    %142 = vector.load %arg2[%c6_78, %c0_79] : memref<9x512xf32, #tpu.memory_space<vmem>>, vector<1x512xf32>
    %143 = vector.broadcast %142 : vector<1x512xf32> to vector<16x512xf32>
    %144 = arith.mulf %116, %143 : vector<16x512xf32>
    %c7_80 = arith.constant 7 : index
    %c0_81 = arith.constant 0 : index
    %145 = vector.load %arg2[%c7_80, %c0_81] : memref<9x512xf32, #tpu.memory_space<vmem>>, vector<1x512xf32>
    %146 = vector.broadcast %145 : vector<1x512xf32> to vector<16x512xf32>
    %147 = arith.mulf %114, %146 : vector<16x512xf32>
    %148 = arith.addf %144, %147 : vector<16x512xf32>
    %c8_82 = arith.constant 8 : index
    %c0_83 = arith.constant 0 : index
    %149 = vector.load %arg2[%c8_82, %c0_83] : memref<9x512xf32, #tpu.memory_space<vmem>>, vector<1x512xf32>
    %150 = vector.broadcast %149 : vector<1x512xf32> to vector<16x512xf32>
    %151 = arith.mulf %117, %150 : vector<16x512xf32>
    %152 = arith.addf %148, %151 : vector<16x512xf32>
    %c15_i32_84 = arith.constant 15 : i32
    %153 = tpu.dynamic_rotate %152 by %c15_i32_84 dim 0 : vector<16x512xf32>, i32 -> vector<16x512xf32>
    %154 = arith.addf %141, %153 : vector<16x512xf32>
    %155 = vector.broadcast %7 : vector<1x512xf32> to vector<16x512xf32>
    %156 = arith.addf %154, %155 : vector<16x512xf32>
    %cst_85 = arith.constant 0.000000e+00 : f32
    %157 = vector.broadcast %cst_85 : f32 to vector<16x512xf32>
    %158 = arith.select %6, %156, %157 : vector<16x512xi1>, vector<16x512xf32>
    %159 = arith.addf %115, %158 : vector<16x512xf32>
    %c32_i32_86 = arith.constant 32 : i32
    %160 = tpu.dynamic_rotate %158 by %c32_i32_86 dim 1 : vector<16x512xf32>, i32 -> vector<16x512xf32>
    %c480_i32_87 = arith.constant 480 : i32
    %161 = tpu.dynamic_rotate %158 by %c480_i32_87 dim 1 : vector<16x512xf32>, i32 -> vector<16x512xf32>
    %c0_88 = arith.constant 0 : index
    %c0_89 = arith.constant 0 : index
    %162 = vector.load %arg2[%c0_88, %c0_89] : memref<9x512xf32, #tpu.memory_space<vmem>>, vector<1x512xf32>
    %163 = vector.broadcast %162 : vector<1x512xf32> to vector<16x512xf32>
    %164 = arith.mulf %160, %163 : vector<16x512xf32>
    %c1_90 = arith.constant 1 : index
    %c0_91 = arith.constant 0 : index
    %165 = vector.load %arg2[%c1_90, %c0_91] : memref<9x512xf32, #tpu.memory_space<vmem>>, vector<1x512xf32>
    %166 = vector.broadcast %165 : vector<1x512xf32> to vector<16x512xf32>
    %167 = arith.mulf %158, %166 : vector<16x512xf32>
    %168 = arith.addf %164, %167 : vector<16x512xf32>
    %c2_92 = arith.constant 2 : index
    %c0_93 = arith.constant 0 : index
    %169 = vector.load %arg2[%c2_92, %c0_93] : memref<9x512xf32, #tpu.memory_space<vmem>>, vector<1x512xf32>
    %170 = vector.broadcast %169 : vector<1x512xf32> to vector<16x512xf32>
    %171 = arith.mulf %161, %170 : vector<16x512xf32>
    %172 = arith.addf %168, %171 : vector<16x512xf32>
    %c1_i32_94 = arith.constant 1 : i32
    %173 = tpu.dynamic_rotate %172 by %c1_i32_94 dim 0 : vector<16x512xf32>, i32 -> vector<16x512xf32>
    %c3_95 = arith.constant 3 : index
    %c0_96 = arith.constant 0 : index
    %174 = vector.load %arg2[%c3_95, %c0_96] : memref<9x512xf32, #tpu.memory_space<vmem>>, vector<1x512xf32>
    %175 = vector.broadcast %174 : vector<1x512xf32> to vector<16x512xf32>
    %176 = arith.mulf %160, %175 : vector<16x512xf32>
    %c4_97 = arith.constant 4 : index
    %c0_98 = arith.constant 0 : index
    %177 = vector.load %arg2[%c4_97, %c0_98] : memref<9x512xf32, #tpu.memory_space<vmem>>, vector<1x512xf32>
    %178 = vector.broadcast %177 : vector<1x512xf32> to vector<16x512xf32>
    %179 = arith.mulf %158, %178 : vector<16x512xf32>
    %180 = arith.addf %176, %179 : vector<16x512xf32>
    %c5_99 = arith.constant 5 : index
    %c0_100 = arith.constant 0 : index
    %181 = vector.load %arg2[%c5_99, %c0_100] : memref<9x512xf32, #tpu.memory_space<vmem>>, vector<1x512xf32>
    %182 = vector.broadcast %181 : vector<1x512xf32> to vector<16x512xf32>
    %183 = arith.mulf %161, %182 : vector<16x512xf32>
    %184 = arith.addf %180, %183 : vector<16x512xf32>
    %185 = arith.addf %173, %184 : vector<16x512xf32>
    %c6_101 = arith.constant 6 : index
    %c0_102 = arith.constant 0 : index
    %186 = vector.load %arg2[%c6_101, %c0_102] : memref<9x512xf32, #tpu.memory_space<vmem>>, vector<1x512xf32>
    %187 = vector.broadcast %186 : vector<1x512xf32> to vector<16x512xf32>
    %188 = arith.mulf %160, %187 : vector<16x512xf32>
    %c7_103 = arith.constant 7 : index
    %c0_104 = arith.constant 0 : index
    %189 = vector.load %arg2[%c7_103, %c0_104] : memref<9x512xf32, #tpu.memory_space<vmem>>, vector<1x512xf32>
    %190 = vector.broadcast %189 : vector<1x512xf32> to vector<16x512xf32>
    %191 = arith.mulf %158, %190 : vector<16x512xf32>
    %192 = arith.addf %188, %191 : vector<16x512xf32>
    %c8_105 = arith.constant 8 : index
    %c0_106 = arith.constant 0 : index
    %193 = vector.load %arg2[%c8_105, %c0_106] : memref<9x512xf32, #tpu.memory_space<vmem>>, vector<1x512xf32>
    %194 = vector.broadcast %193 : vector<1x512xf32> to vector<16x512xf32>
    %195 = arith.mulf %161, %194 : vector<16x512xf32>
    %196 = arith.addf %192, %195 : vector<16x512xf32>
    %c15_i32_107 = arith.constant 15 : i32
    %197 = tpu.dynamic_rotate %196 by %c15_i32_107 dim 0 : vector<16x512xf32>, i32 -> vector<16x512xf32>
    %198 = arith.addf %185, %197 : vector<16x512xf32>
    %199 = vector.broadcast %7 : vector<1x512xf32> to vector<16x512xf32>
    %200 = arith.addf %198, %199 : vector<16x512xf32>
    %cst_108 = arith.constant 0.000000e+00 : f32
    %201 = vector.broadcast %cst_108 : f32 to vector<16x512xf32>
    %202 = arith.select %6, %200, %201 : vector<16x512xi1>, vector<16x512xf32>
    %203 = arith.addf %159, %202 : vector<16x512xf32>
    %cst_109 = arith.constant 0.000000e+00 : f32
    %204 = vector.broadcast %cst_109 : f32 to vector<16x512xf32>
    %205 = arith.maximumf %202, %204 : vector<16x512xf32>
    %206 = arith.addf %203, %205 : vector<16x512xf32>
    %c0_110 = arith.constant 0 : index
    %c0_111 = arith.constant 0 : index
    %207 = vector.load %arg4[%c0_110, %c0_111] : memref<16x512xf32, #tpu.memory_space<vmem>>, vector<16x512xf32>
    tpu.vector_store %arg4[%c0_110, %c0_111], %206 {strides = array<i32>} : memref<16x512xf32, #tpu.memory_space<vmem>>, vector<16x512xf32>,
    return
  }
  func.func @transform_0(%arg0: i32) -> (i32, i32, i32) {
    %c0_i32 = arith.constant 0 : i32
    %c0_i32_0 = arith.constant 0 : i32
    %c0_i32_1 = arith.constant 0 : i32
    %c0_i32_2 = arith.constant 0 : i32
    return %c0_i32, %c0_i32_0, %c0_i32_1 : i32, i32, i32
  }
  func.func @transform_1(%arg0: i32) -> (i32, i32) {
    %c0_i32 = arith.constant 0 : i32
    %c0_i32_0 = arith.constant 0 : i32
    %c0_i32_1 = arith.constant 0 : i32
    return %c0_i32, %c0_i32_0 : i32, i32
  }
  func.func @transform_2(%arg0: i32) -> (i32, i32) {
    %c0_i32 = arith.constant 0 : i32
    %c0_i32_0 = arith.constant 0 : i32
    %c0_i32_1 = arith.constant 0 : i32
    return %c0_i32, %c0_i32_0 : i32, i32
  }
  func.func @transform_3(%arg0: i32) -> (i32, i32) {
    %c0_i32 = arith.constant 0 : i32
    %c0_i32_0 = arith.constant 0 : i32
    %c0_i32_1 = arith.constant 0 : i32
    return %c0_i32, %c0_i32_0 : i32, i32
  }
}

</mosaic_0001>

<llo_original>
// kernel: tile.16
$region0: #{tile.16}
  #allocation0 [shape = 's32[1]{0}', space=sflag, size = 0x4, scoped, tag = 'scoped memory for tile.16']
  %s0 = inlined_call_operand.vmem [shape: f32[32], index: 0, kind: input, shape index: {}]
  %s1 = inlined_call_operand.vmem [shape: f32[16,32], index: 1, kind: output, shape index: {}]
  // Predicated region
  $region2: #{tile.16} parent=0 // pred_check
    _
  $region3: #{tile.16} parent=0 // pred_check_branch
    %3 = sbr.rel (0) target = $region5
  $region4: #{tile.16} parent=0 // pred_region
    _
  $region5: #{tile.16} parent=0 // pred_fallthru
    _
  %v4 = vld [vmem:[%s0] ss:$0 sm:$0xff]
  %5 = vst [vmem:[%s1] sm:$0xff] %v4
  %s6 = scalar_lea.vmem %s1, 8
  %7 = vst [vmem:[%s6] sm:$0xff] %v4

// kernel: tile.12
$region0: #{tile.12}
  %s0 = inlined_call_operand.vmem [shape: f32[9,16,32], index: 0, kind: input, shape index: {}]
  %s1 = inlined_call_operand.vmem [shape: f32[9,512], index: 1, kind: output, shape index: {}]
  %v2 = vld [vmem:[%s0] ss:$4 sm:$0xff]
  %vm3 = vcmask 261120
  %4 = vst.msk [vmem:[%s1] ss:$8 sm:$0xf] %vm3, %v2
  %s5 = scalar_lea.vmem %s1, 4294967265
  %6 = vst.msk [vmem:[%s5] ss:$8 sm:$0xf0] %vm3, %v2
  %s7 = scalar_lea.vmem %s0, 32
  %v8 = vld [vmem:[%s7] ss:$4 sm:$0xff]
  %vm9 = vcmask 261120
  %s10 = scalar_lea.vmem %s1, 2
  %11 = vst.msk [vmem:[%s10] ss:$8 sm:$0xf] %vm9, %v8
  %s12 = scalar_lea.vmem %s1, 4294967267
  %13 = vst.msk [vmem:[%s12] ss:$8 sm:$0xf0] %vm9, %v8
  %s14 = scalar_lea.vmem %s0, 64
  %v15 = vld [vmem:[%s14] ss:$4 sm:$0xff]
  %vm16 = vcmask 261120
  %s17 = scalar_lea.vmem %s1, 4
  %18 = vst.msk [vmem:[%s17] ss:$8 sm:$0xf] %vm16, %v15
  %s19 = scalar_lea.vmem %s1, 4294967269
  %20 = vst.msk [vmem:[%s19] ss:$8 sm:$0xf0] %vm16, %v15
  %s21 = scalar_lea.vmem %s0, 96
  %v22 = vld [vmem:[%s21] ss:$4 sm:$0xff]
  %vm23 = vcmask 261120
  %s24 = scalar_lea.vmem %s1, 6
  %25 = vst.msk [vmem:[%s24] ss:$8 sm:$0xf] %vm23, %v22
  %s26 = scalar_lea.vmem %s1, 4294967271
  %27 = vst.msk [vmem:[%s26] ss:$8 sm:$0xf0] %vm23, %v22
  %s28 = scalar_lea.vmem %s0, 128
  %v29 = vld [vmem:[%s28] ss:$4 sm:$0xf]
  %vm30 = vcmask 261120
  %s31 = scalar_lea.vmem %s1, 32
  %32 = vst.msk [vmem:[%s31] ss:$8 sm:$0xf] %vm30, %v29
  %s33 = scalar_lea.vmem %s0, 3
  %s34 = smov 3
  %v35 = vld [vmem:[%s33] ss:$16 sm:%s34]
  %s36 = scalar_lea.vmem %s0, 3
  %s37 = smov 12
  %v38 = vld [vmem:[%s36] ss:$16 sm:%s37]
  %vm39 = vcmask 1043458
  %v40 = vsel %vm39, %v38, %v35
  %s41 = scalar_lea.vmem %s0, 3
  %s42 = smov 48
  %v43 = vld [vmem:[%s41] ss:$16 sm:%s42]
  %vm44 = vcmask 1045508
  %v45 = vsel %vm44, %v43, %v40
  %s46 = scalar_lea.vmem %s0, 3
  %s47 = smov 192
  %v48 = vld [vmem:[%s46] ss:$16 sm:%s47]
  %vm49 = vcmask 1047558
  %v50 = vsel %vm49, %v48, %v45
  %51 = vrot.lane.b32.xlu0 %v50, 96
  %v52 = vpop.permute.xlu0 %51
  %vm53 = vcmask 1048320
  %54 = vst.msk [vmem:[%s1] sm:$0xff] %vm53, %v52
  %s55 = scalar_lea.vmem %s0, 131
  %s56 = smov 3
  %v57 = vld [vmem:[%s55] ss:$-124 sm:%s56]
  %s58 = scalar_lea.vmem %s0, 4294967287
  %s59 = smov 12
  %v60 = vld [vmem:[%s58] ss:$16 sm:%s59]
  %vm61 = vcmask 1043458
  %v62 = vsel %vm61, %v60, %v57
  %s63 = scalar_lea.vmem %s0, 4294967287
  %s64 = smov 48
  %v65 = vld [vmem:[%s63] ss:$16 sm:%s64]
  %vm66 = vcmask 1045508
  %v67 = vsel %vm66, %v65, %v62
  %s68 = scalar_lea.vmem %s0, 4294967287
  %s69 = smov 192
  %v70 = vld [vmem:[%s68] ss:$16 sm:%s69]
  %vm71 = vcmask 1047558
  %v72 = vsel %vm71, %v70, %v67
  %73 = vrot.lane.b32.xlu0 %v72, 96
  %v74 = vpop.permute.xlu0 %73
  %vm75 = vcmask 1048320
  %s76 = scalar_lea.vmem %s1, 32
  %77 = vst.msk [vmem:[%s76] ss:$-24 sm:$0x3] %vm75, %v74
  %s78 = scalar_lea.vmem %s1, 7
  %79 = vst.msk [vmem:[%s78] sm:$0xfc] %vm75, %v74
  %s80 = scalar_lea.vmem %s0, 135
  %s81 = smov 3
  %v82 = vld [vmem:[%s80] ss:$-16 sm:%s81]
  %s83 = scalar_lea.vmem %s0, 4294967275
  %s84 = smov 12
  %v85 = vld [vmem:[%s83] ss:$16 sm:%s84]
  %vm86 = vcmask 1043458
  %v87 = vsel %vm86, %v85, %v82
  %s88 = scalar_lea.vmem %s0, 4294967275
  %s89 = smov 48
  %v90 = vld [vmem:[%s88] ss:$16 sm:%s89]
  %vm91 = vcmask 1045508
  %v92 = vsel %vm91, %v90, %v87
  %s93 = scalar_lea.vmem %s0, 4294967275
  %s94 = smov 192
  %v95 = vld [vmem:[%s93] ss:$16 sm:%s94]
  %vm96 = vcmask 1047558
  %v97 = vsel %vm96, %v95, %v92
  %98 = vrot.lane.b32.xlu0 %v97, 96
  %v99 = vpop.permute.xlu0 %98
  %vm100 = vcmask 1048320
  %s101 = scalar_lea.vmem %s1, 40
  %102 = vst.msk [vmem:[%s101] ss:$-25 sm:$0x3] %vm100, %v99
  %s103 = scalar_lea.vmem %s1, 14
  %104 = vst.msk [vmem:[%s103] sm:$0xfc] %vm100, %v99
  %s105 = scalar_lea.vmem %s0, 139
  %v106 = vld [vmem:[%s105] sm:$0x1]
  %s107 = scalar_lea.vmem %s0, 91
  %s108 = smov 6
  %v109 = vld [vmem:[%s107] ss:$16 sm:%s108]
  %vm110 = vcmask 1042433
  %v111 = vsel %vm110, %v109, %v106
  %s112 = scalar_lea.vmem %s0, 4294967263
  %s113 = smov 24
  %v114 = vld [vmem:[%s112] ss:$16 sm:%s113]
  %vm115 = vcmask 1044483
  %v116 = vsel %vm115, %v114, %v111
  %s117 = scalar_lea.vmem %s0, 4294967263
  %s118 = smov 96
  %v119 = vld [vmem:[%s117] ss:$16 sm:%s118]
  %vm120 = vcmask 1046533
  %v121 = vsel %vm120, %v119, %v116
  %s122 = scalar_lea.vmem %s0, 72
  %v123 = vld [vmem:[%s122] sm:$0x80]
  %vm124 = vcmask 1047559
  %v125 = vsel %vm124, %v123, %v121
  %126 = vrot.lane.b32.xlu0 %v125, 96
  %v127 = vpop.permute.xlu0 %126
  %vm128 = vcmask 1048320
  %s129 = scalar_lea.vmem %s1, 48
  %130 = vst.msk [vmem:[%s129] ss:$-26 sm:$0x3] %vm128, %v127
  %s131 = scalar_lea.vmem %s1, 21
  %132 = vst.msk [vmem:[%s131] sm:$0xfc] %vm128, %v127
  %s133 = scalar_lea.vmem %s0, 143
  %s134 = smov 3
  %v135 = vld [vmem:[%s133] ss:$-48 sm:%s134]
  %s136 = scalar_lea.vmem %s0, 79
  %s137 = smov 12
  %v138 = vld [vmem:[%s136] ss:$16 sm:%s137]
  %vm139 = vcmask 1043458
  %v140 = vsel %vm139, %v138, %v135
  %141 = vrot.lane.b32.xlu0 %v140, 96
  %v142 = vpop.permute.xlu0 %141
  %vm143 = vcmask 1048320
  %s144 = scalar_lea.vmem %s1, 56
  %145 = vst.msk [vmem:[%s144] ss:$-27 sm:$0x3] %vm143, %v142
  %s146 = scalar_lea.vmem %s1, 28
  %147 = vst.msk [vmem:[%s146] sm:$0xc] %vm143, %v142
  %s148 = scalar_lea.vmem %s0, 2
  %s149 = smov 3
  %v150 = vld [vmem:[%s148] ss:$16 sm:%s149]
  %s151 = scalar_lea.vmem %s0, 2
  %s152 = smov 12
  %v153 = vld [vmem:[%s151] ss:$16 sm:%s152]
  %vm154 = vcmask 1043458
  %v155 = vsel %vm154, %v153, %v150
  %s156 = scalar_lea.vmem %s0, 2
  %s157 = smov 48
  %v158 = vld [vmem:[%s156] ss:$16 sm:%s157]
  %vm159 = vcmask 1045508
  %v160 = vsel %vm159, %v158, %v155
  %s161 = scalar_lea.vmem %s0, 2
  %s162 = smov 192
  %v163 = vld [vmem:[%s161] ss:$16 sm:%s162]
  %vm164 = vcmask 1047558
  %v165 = vsel %vm164, %v163, %v160
  %166 = vrot.lane.b32.xlu0 %v165, 64
  %v167 = vpop.permute.xlu0 %166
  %vm168 = vcmask 785920
  %169 = vst.msk [vmem:[%s1] sm:$0xff] %vm168, %v167
  %s170 = scalar_lea.vmem %s0, 130
  %s171 = smov 3
  %v172 = vld [vmem:[%s170] ss:$-124 sm:%s171]
  %s173 = scalar_lea.vmem %s0, 4294967286
  %s174 = smov 12
  %v175 = vld [vmem:[%s173] ss:$16 sm:%s174]
  %vm176 = vcmask 1043458
  %v177 = vsel %vm176, %v175, %v172
  %s178 = scalar_lea.vmem %s0, 4294967286
  %s179 = smov 48
  %v180 = vld [vmem:[%s178] ss:$16 sm:%s179]
  %vm181 = vcmask 1045508
  %v182 = vsel %vm181, %v180, %v177
  %s183 = scalar_lea.vmem %s0, 4294967286
  %s184 = smov 192
  %v185 = vld [vmem:[%s183] ss:$16 sm:%s184]
  %vm186 = vcmask 1047558
  %v187 = vsel %vm186, %v185, %v182
  %188 = vrot.lane.b32.xlu0 %v187, 64
  %v189 = vpop.permute.xlu0 %188
  %vm190 = vcmask 785920
  %s191 = scalar_lea.vmem %s1, 32
  %192 = vst.msk [vmem:[%s191] ss:$-24 sm:$0x3] %vm190, %v189
  %s193 = scalar_lea.vmem %s1, 7
  %194 = vst.msk [vmem:[%s193] sm:$0xfc] %vm190, %v189
  %s195 = scalar_lea.vmem %s0, 134
  %s196 = smov 3
  %v197 = vld [vmem:[%s195] ss:$-16 sm:%s196]
  %s198 = scalar_lea.vmem %s0, 4294967274
  %s199 = smov 12
  %v200 = vld [vmem:[%s198] ss:$16 sm:%s199]
  %vm201 = vcmask 1043458
  %v202 = vsel %vm201, %v200, %v197
  %s203 = scalar_lea.vmem %s0, 4294967274
  %s204 = smov 48
  %v205 = vld [vmem:[%s203] ss:$16 sm:%s204]
  %vm206 = vcmask 1045508
  %v207 = vsel %vm206, %v205, %v202
  %s208 = scalar_lea.vmem %s0, 4294967274
  %s209 = smov 192
  %v210 = vld [vmem:[%s208] ss:$16 sm:%s209]
  %vm211 = vcmask 1047558
  %v212 = vsel %vm211, %v210, %v207
  %213 = vrot.lane.b32.xlu0 %v212, 64
  %v214 = vpop.permute.xlu0 %213
  %vm215 = vcmask 785920
  %s216 = scalar_lea.vmem %s1, 40
  %217 = vst.msk [vmem:[%s216] ss:$-25 sm:$0x3] %vm215, %v214
  %s218 = scalar_lea.vmem %s1, 14
  %219 = vst.msk [vmem:[%s218] sm:$0xfc] %vm215, %v214
  %s220 = scalar_lea.vmem %s0, 138
  %v221 = vld [vmem:[%s220] sm:$0x1]
  %s222 = scalar_lea.vmem %s0, 90
  %s223 = smov 6
  %v224 = vld [vmem:[%s222] ss:$16 sm:%s223]
  %vm225 = vcmask 1042433
  %v226 = vsel %vm225, %v224, %v221
  %s227 = scalar_lea.vmem %s0, 4294967262
  %s228 = smov 24
  %v229 = vld [vmem:[%s227] ss:$16 sm:%s228]
  %vm230 = vcmask 1044483
  %v231 = vsel %vm230, %v229, %v226
  %s232 = scalar_lea.vmem %s0, 4294967262
  %s233 = smov 96
  %v234 = vld [vmem:[%s232] ss:$16 sm:%s233]
  %vm235 = vcmask 1046533
  %v236 = vsel %vm235, %v234, %v231
  %s237 = scalar_lea.vmem %s0, 71
  %v238 = vld [vmem:[%s237] sm:$0x80]
  %vm239 = vcmask 1047559
  %v240 = vsel %vm239, %v238, %v236
  %241 = vrot.lane.b32.xlu0 %v240, 64
  %v242 = vpop.permute.xlu0 %241
  %vm243 = vcmask 785920
  %s244 = scalar_lea.vmem %s1, 48
  %245 = vst.msk [vmem:[%s244] ss:$-26 sm:$0x3] %vm243, %v242
  %s246 = scalar_lea.vmem %s1, 21
  %247 = vst.msk [vmem:[%s246] sm:$0xfc] %vm243, %v242
  %s248 = scalar_lea.vmem %s0, 142
  %s249 = smov 3
  %v250 = vld [vmem:[%s248] ss:$-48 sm:%s249]
  %s251 = scalar_lea.vmem %s0, 78
  %s252 = smov 12
  %v253 = vld [vmem:[%s251] ss:$16 sm:%s252]
  %vm254 = vcmask 1043458
  %v255 = vsel %vm254, %v253, %v250
  %256 = vrot.lane.b32.xlu0 %v255, 64
  %v257 = vpop.permute.xlu0 %256
  %vm258 = vcmask 785920
  %s259 = scalar_lea.vmem %s1, 56
  %260 = vst.msk [vmem:[%s259] ss:$-27 sm:$0x3] %vm258, %v257
  %s261 = scalar_lea.vmem %s1, 28
  %262 = vst.msk [vmem:[%s261] sm:$0xc] %vm258, %v257
  %s263 = scalar_lea.vmem %s0, 1
  %s264 = smov 3
  %v265 = vld [vmem:[%s263] ss:$16 sm:%s264]
  %s266 = scalar_lea.vmem %s0, 1
  %s267 = smov 12
  %v268 = vld [vmem:[%s266] ss:$16 sm:%s267]
  %vm269 = vcmask 1043458
  %v270 = vsel %vm269, %v268, %v265
  %s271 = scalar_lea.vmem %s0, 1
  %s272 = smov 48
  %v273 = vld [vmem:[%s271] ss:$16 sm:%s272]
  %vm274 = vcmask 1045508
  %v275 = vsel %vm274, %v273, %v270
  %s276 = scalar_lea.vmem %s0, 1
  %s277 = smov 192
  %v278 = vld [vmem:[%s276] ss:$16 sm:%s277]
  %vm279 = vcmask 1047558
  %v280 = vsel %vm279, %v278, %v275
  %281 = vrot.lane.b32.xlu0 %v280, 32
  %v282 = vpop.permute.xlu0 %281
  %vm283 = vcmask 523520
  %284 = vst.msk [vmem:[%s1] sm:$0xff] %vm283, %v282
  %s285 = scalar_lea.vmem %s0, 129
  %s286 = smov 3
  %v287 = vld [vmem:[%s285] ss:$-124 sm:%s286]
  %s288 = scalar_lea.vmem %s0, 4294967285
  %s289 = smov 12
  %v290 = vld [vmem:[%s288] ss:$16 sm:%s289]
  %vm291 = vcmask 1043458
  %v292 = vsel %vm291, %v290, %v287
  %s293 = scalar_lea.vmem %s0, 4294967285
  %s294 = smov 48
  %v295 = vld [vmem:[%s293] ss:$16 sm:%s294]
  %vm296 = vcmask 1045508
  %v297 = vsel %vm296, %v295, %v292
  %s298 = scalar_lea.vmem %s0, 4294967285
  %s299 = smov 192
  %v300 = vld [vmem:[%s298] ss:$16 sm:%s299]
  %vm301 = vcmask 1047558
  %v302 = vsel %vm301, %v300, %v297
  %303 = vrot.lane.b32.xlu0 %v302, 32
  %v304 = vpop.permute.xlu0 %303
  %vm305 = vcmask 523520
  %s306 = scalar_lea.vmem %s1, 32
  %307 = vst.msk [vmem:[%s306] ss:$-24 sm:$0x3] %vm305, %v304
  %s308 = scalar_lea.vmem %s1, 7
  %309 = vst.msk [vmem:[%s308] sm:$0xfc] %vm305, %v304
  %s310 = scalar_lea.vmem %s0, 133
  %s311 = smov 3
  %v312 = vld [vmem:[%s310] ss:$-16 sm:%s311]
  %s313 = scalar_lea.vmem %s0, 4294967273
  %s314 = smov 12
  %v315 = vld [vmem:[%s313] ss:$16 sm:%s314]
  %vm316 = vcmask 1043458
  %v317 = vsel %vm316, %v315, %v312
  %s318 = scalar_lea.vmem %s0, 4294967273
  %s319 = smov 48
  %v320 = vld [vmem:[%s318] ss:$16 sm:%s319]
  %vm321 = vcmask 1045508
  %v322 = vsel %vm321, %v320, %v317
  %s323 = scalar_lea.vmem %s0, 4294967273
  %s324 = smov 192
  %v325 = vld [vmem:[%s323] ss:$16 sm:%s324]
  %vm326 = vcmask 1047558
  %v327 = vsel %vm326, %v325, %v322
  %328 = vrot.lane.b32.xlu0 %v327, 32
  %v329 = vpop.permute.xlu0 %328
  %vm330 = vcmask 523520
  %s331 = scalar_lea.vmem %s1, 40
  %332 = vst.msk [vmem:[%s331] ss:$-25 sm:$0x3] %vm330, %v329
  %s333 = scalar_lea.vmem %s1, 14
  %334 = vst.msk [vmem:[%s333] sm:$0xfc] %vm330, %v329
  %s335 = scalar_lea.vmem %s0, 137
  %v336 = vld [vmem:[%s335] sm:$0x1]
  %s337 = scalar_lea.vmem %s0, 89
  %s338 = smov 6
  %v339 = vld [vmem:[%s337] ss:$16 sm:%s338]
  %vm340 = vcmask 1042433
  %v341 = vsel %vm340, %v339, %v336
  %s342 = scalar_lea.vmem %s0, 4294967261
  %s343 = smov 24
  %v344 = vld [vmem:[%s342] ss:$16 sm:%s343]
  %vm345 = vcmask 1044483
  %v346 = vsel %vm345, %v344, %v341
  %s347 = scalar_lea.vmem %s0, 4294967261
  %s348 = smov 96
  %v349 = vld [vmem:[%s347] ss:$16 sm:%s348]
  %vm350 = vcmask 1046533
  %v351 = vsel %vm350, %v349, %v346
  %s352 = scalar_lea.vmem %s0, 70
  %v353 = vld [vmem:[%s352] sm:$0x80]
  %vm354 = vcmask 1047559
  %v355 = vsel %vm354, %v353, %v351
  %356 = vrot.lane.b32.xlu0 %v355, 32
  %v357 = vpop.permute.xlu0 %356
  %vm358 = vcmask 523520
  %s359 = scalar_lea.vmem %s1, 48
  %360 = vst.msk [vmem:[%s359] ss:$-26 sm:$0x3] %vm358, %v357
  %s361 = scalar_lea.vmem %s1, 21
  %362 = vst.msk [vmem:[%s361] sm:$0xfc] %vm358, %v357
  %s363 = scalar_lea.vmem %s0, 141
  %s364 = smov 3
  %v365 = vld [vmem:[%s363] ss:$-48 sm:%s364]
  %s366 = scalar_lea.vmem %s0, 77
  %s367 = smov 12
  %v368 = vld [vmem:[%s366] ss:$16 sm:%s367]
  %vm369 = vcmask 1043458
  %v370 = vsel %vm369, %v368, %v365
  %371 = vrot.lane.b32.xlu0 %v370, 32
  %v372 = vpop.permute.xlu0 %371
  %vm373 = vcmask 523520
  %s374 = scalar_lea.vmem %s1, 56
  %375 = vst.msk [vmem:[%s374] ss:$-27 sm:$0x3] %vm373, %v372
  %s376 = scalar_lea.vmem %s1, 28
  %377 = vst.msk [vmem:[%s376] sm:$0xc] %vm373, %v372

// kernel: tile.17
$region0: #{tile.17}
  %s0 = inlined_call_operand.vmem [shape: f32[16,32], index: 0, kind: input, shape index: {}]
  %s1 = inlined_call_operand.vmem [shape: f32[1,512], index: 1, kind: output, shape index: {}]
  $region1: #{tile.17} parent=0
    #allocation0 [shape = 'u8[16384]{0}', space=vmem, size = 0x4000, scoped, tag = 'scoped mem for output reshape']
    %v2 = vld [vmem:[%s0] ss:$4 sm:$0xf]
    %vm3 = vcmask 261120
    %4 = vst.msk [vmem:[#allocation0] ss:$8 sm:$0xf] %vm3, %v2
    %s5 = scalar_lea.vmem %s0, 3
    %v6 = vld [vmem:[%s5] ss:$4 sm:$0xf]
    %7 = vrot.lane.b32.xlu0 %v6, 96
    %v8 = vpop.permute.xlu0 %7
    %vm9 = vcmask 1048320
    %10 = vst.msk [vmem:[#allocation0] ss:$8 sm:$0xf] %vm9, %v8
    %s11 = scalar_lea.vmem %s0, 2
    %v12 = vld [vmem:[%s11] ss:$4 sm:$0xf]
    %13 = vrot.lane.b32.xlu0 %v12, 64
    %v14 = vpop.permute.xlu0 %13
    %vm15 = vcmask 785920
    %16 = vst.msk [vmem:[#allocation0] ss:$8 sm:$0xf] %vm15, %v14
    %s17 = scalar_lea.vmem %s0, 1
    %v18 = vld [vmem:[%s17] ss:$4 sm:$0xf]
    %19 = vrot.lane.b32.xlu0 %v18, 32
    %v20 = vpop.permute.xlu0 %19
    %vm21 = vcmask 523520
    %22 = vst.msk [vmem:[#allocation0] ss:$8 sm:$0xf] %vm21, %v20
    %s24 = sshllo.u32 0, 1
    %v26 = vld [vmem:[#allocation0] sm:%s24]
    %s27 = sshllo.u32 0, 1
    %28 = vst [vmem:[%s1] sm:%s27] %v26
    %s29 = scalar_lea.vmem [#allocation0], 8
    %v30 = vld [vmem:[%s29] sm:%s24]
    %s31 = sshllo.u32 0, 1
    %s32 = scalar_lea.vmem %s1, 1
    %33 = vst [vmem:[%s32] sm:%s31] %v30
    %s34 = scalar_lea.vmem [#allocation0], 16
    %v35 = vld [vmem:[%s34] sm:%s24]
    %s36 = sshllo.u32 0, 1
    %s37 = smul.addr 1, 2
    %s38 = scalar_lea.vmem %s1, %s37
    %39 = vst [vmem:[%s38] sm:%s36] %v35
    %s40 = scalar_lea.vmem [#allocation0], 24
    %v41 = vld [vmem:[%s40] sm:%s24]
    %s42 = sshllo.u32 0, 1
    %s43 = smul.addr 1, 3
    %s44 = scalar_lea.vmem %s1, %s43
    %45 = vst [vmem:[%s44] sm:%s42] %v41

// kernel: model_forward.1
$region0: #{model_forward.1}
  #allocation0 [shape = 'u32[]', space=smem, size = 0x4, offset = 0x4, fixed_abs, tag = 'smem constant byte address 0x4 - core index']
  #allocation1 [shape = 'u32[144,128]{1,0:T(1,128)}', space=vmem, size = 0x12000, scoped, tag = 'internal scratch']
  %s0 = inlined_call_operand.vmem [shape: f32[4,24,512], index: 0, kind: input, shape index: {}]
  %s1 = inlined_call_operand.vmem [shape: f32[9,512], index: 1, kind: input, shape index: {}]
  %s2 = inlined_call_operand.vmem [shape: f32[1,512], index: 2, kind: input, shape index: {}]
  %s3 = inlined_call_operand.vmem [shape: f32[16,512], index: 3, kind: output, shape index: {}]
  %s4 = sld [smem:[#allocation0]]
  $region22: #{model_forward.1} parent=0
    _
  %s6 = ssub.s32 1, %s4
  %s7 = scalar_select 0, %s6, %s4
  // Predicated region
  $region2: #{model_forward.1} parent=0 // pred_check
    _
  $region3: #{model_forward.1} parent=0 // pred_check_branch
    %9 = sbr.rel (0) target = $region5
  $region4: #{model_forward.1} parent=0 // pred_region
    _
  $region5: #{model_forward.1} parent=0 // pred_fallthru
    _
  // Predicated region
  $region6: #{model_forward.1} parent=0 // pred_check
    _
  $region7: #{model_forward.1} parent=0 // pred_check_branch
    %11 = sbr.rel (0) target = $region9
  $region8: #{model_forward.1} parent=0 // pred_region
    _
  $region9: #{model_forward.1} parent=0 // pred_fallthru
    _
  // Predicated region
  $region10: #{model_forward.1} parent=0 // pred_check
    _
  $region11: #{model_forward.1} parent=0 // pred_check_branch
    %13 = sbr.rel (0) target = $region13
  $region12: #{model_forward.1} parent=0 // pred_region
    _
  $region13: #{model_forward.1} parent=0 // pred_fallthru
    _
  %v14 = vlaneseq
  %v15 = vshrl.u32 %v14, 7
  %v16 = vadd.s32 %v15, 8
  %v17 = vlaneseq
  %v18 = vand.u32 %v17, 127
  %v19 = vadd.s32 %v18, 128
  %v20 = vadd.s32 %v18, 256
  %v21 = vadd.s32 %v18, 384
  %vm22 = vcmp.lt.s32.totalorder %v15, 13
  %vm23 = vcmp.lt.s32.totalorder %v16, 13
  %vm24 = vcmp.lt.s32.totalorder %v18, 480
  %vm25 = vcmp.lt.s32.totalorder %v19, 480
  %vm26 = vcmp.lt.s32.totalorder %v20, 480
  %vm27 = vcmp.lt.s32.totalorder %v21, 480
  %vm28 = vmand %vm22, %vm24
  %vm29 = vmand %vm22, %vm25
  %vm30 = vmand %vm22, %vm26
  %vm31 = vmand %vm22, %vm27
  %vm32 = vmand %vm23, %vm24
  %vm33 = vmand %vm23, %vm25
  %vm34 = vmand %vm23, %vm26
  %vm35 = vmand %vm23, %vm27
  %v36 = vld [vmem:[%s2] sm:$0xf]
  %v37 = vld [vmem:[%s0] sm:$0xff]
  %v38 = vld [vmem:[%s0 + $0x8] sm:$0xff]
  %v39 = vld [vmem:[%s0 + $0x10] sm:$0xff]
  %v40 = vld [vmem:[%s0 + $0x18] sm:$0xff]
  %v41 = vld [vmem:[%s0 + $0x20] sm:$0xff]
  %v42 = vld [vmem:[%s0 + $0x28] sm:$0xff]
  %v43 = vld [vmem:[%s0 + $0x30] sm:$0xff]
  %v44 = vld [vmem:[%s0 + $0x38] sm:$0xff]
  %v45 = vld [vmem:[%s1] ss:$8 sm:$0xf]
  %v47 = vlaneseq
  %v48 = vshrl.u32 %v47, 7
  %v49 = vsub.s32 0, %v48
  %v50 = vrot.slane %v45, %v49
  %v51 = vlaneseq
  %v52 = vshrl.u32 %v51, 7
  %v53 = vsub.s32 1, %v52
  %v54 = vrot.slane %v45, %v53
  %v55 = vlaneseq
  %v56 = vshrl.u32 %v55, 7
  %v57 = vsub.s32 2, %v56
  %v58 = vrot.slane %v45, %v57
  %v59 = vlaneseq
  %v60 = vshrl.u32 %v59, 7
  %v61 = vsub.s32 3, %v60
  %v62 = vrot.slane %v45, %v61
  %v67 = vmul.f32 %v37, %v50
  %v68 = vmul.f32 %v38, %v54
  %v69 = vmul.f32 %v39, %v58
  %v70 = vmul.f32 %v40, %v62
  %v71 = vmul.f32 %v41, %v50
  %v72 = vmul.f32 %v42, %v54
  %v73 = vmul.f32 %v43, %v58
  %v74 = vmul.f32 %v44, %v62
  %s75 = scalar_lea.vmem %s0, 96
  %v76 = vld [vmem:[%s75] sm:$0xff]
  %v77 = vld [vmem:[%s75 + $0x8] sm:$0xff]
  %v78 = vld [vmem:[%s75 + $0x10] sm:$0xff]
  %v79 = vld [vmem:[%s75 + $0x18] sm:$0xff]
  %v80 = vld [vmem:[%s75 + $0x20] sm:$0xff]
  %v81 = vld [vmem:[%s75 + $0x28] sm:$0xff]
  %v82 = vld [vmem:[%s75 + $0x30] sm:$0xff]
  %v83 = vld [vmem:[%s75 + $0x38] sm:$0xff]
  %s84 = scalar_lea.vmem %s1, 1
  %v85 = vld [vmem:[%s84] ss:$8 sm:$0xf]
  %v87 = vlaneseq
  %v88 = vshrl.u32 %v87, 7
  %v89 = vsub.s32 0, %v88
  %v90 = vrot.slane %v85, %v89
  %v91 = vlaneseq
  %v92 = vshrl.u32 %v91, 7
  %v93 = vsub.s32 1, %v92
  %v94 = vrot.slane %v85, %v93
  %v95 = vlaneseq
  %v96 = vshrl.u32 %v95, 7
  %v97 = vsub.s32 2, %v96
  %v98 = vrot.slane %v85, %v97
  %v99 = vlaneseq
  %v100 = vshrl.u32 %v99, 7
  %v101 = vsub.s32 3, %v100
  %v102 = vrot.slane %v85, %v101
  %v107 = vmul.f32 %v76, %v90
  %v108 = vmul.f32 %v77, %v94
  %v109 = vmul.f32 %v78, %v98
  %v110 = vmul.f32 %v79, %v102
  %v111 = vmul.f32 %v80, %v90
  %v112 = vmul.f32 %v81, %v94
  %v113 = vmul.f32 %v82, %v98
  %v114 = vmul.f32 %v83, %v102
  %v115 = vadd.f32 %v67, %v107
  %v116 = vadd.f32 %v68, %v108
  %v117 = vadd.f32 %v69, %v109
  %v118 = vadd.f32 %v70, %v110
  %v119 = vadd.f32 %v71, %v111
  %v120 = vadd.f32 %v72, %v112
  %v121 = vadd.f32 %v73, %v113
  %v122 = vadd.f32 %v74, %v114
  %123 = vrot.lane.b32.xlu0 %v37, 96
  %v124 = vpop.permute.xlu0 %123
  %125 = vrot.lane.b32.xlu0 %v41, 96
  %v126 = vpop.permute.xlu0 %125
  %127 = vrot.lane.b32.xlu0 %v38, 96
  %v128 = vpop.permute.xlu0 %127
  %129 = vrot.lane.b32.xlu0 %v42, 96
  %v130 = vpop.permute.xlu0 %129
  %131 = vrot.lane.b32.xlu0 %v39, 96
  %v132 = vpop.permute.xlu0 %131
  %133 = vrot.lane.b32.xlu0 %v43, 96
  %v134 = vpop.permute.xlu0 %133
  %135 = vrot.lane.b32.xlu0 %v40, 96
  %v136 = vpop.permute.xlu0 %135
  %137 = vrot.lane.b32.xlu0 %v44, 96
  %v138 = vpop.permute.xlu0 %137
  %vm139 = vcmp.lt.s32.totalorder %v18, 96
  %v140 = vsel %vm139, %v132, %v136
  %v141 = vsel %vm139, %v134, %v138
  %v142 = vsel %vm139, %v128, %v132
  %v143 = vsel %vm139, %v130, %v134
  %v144 = vsel %vm139, %v124, %v128
  %v145 = vsel %vm139, %v126, %v130
  %v146 = vsel %vm139, %v136, %v124
  %v147 = vsel %vm139, %v138, %v126
  %s148 = scalar_lea.vmem %s1, 2
  %v149 = vld [vmem:[%s148] ss:$8 sm:$0xf]
  %v151 = vlaneseq
  %v152 = vshrl.u32 %v151, 7
  %v153 = vsub.s32 0, %v152
  %v154 = vrot.slane %v149, %v153
  %v155 = vlaneseq
  %v156 = vshrl.u32 %v155, 7
  %v157 = vsub.s32 1, %v156
  %v158 = vrot.slane %v149, %v157
  %v159 = vlaneseq
  %v160 = vshrl.u32 %v159, 7
  %v161 = vsub.s32 2, %v160
  %v162 = vrot.slane %v149, %v161
  %v163 = vlaneseq
  %v164 = vshrl.u32 %v163, 7
  %v165 = vsub.s32 3, %v164
  %v166 = vrot.slane %v149, %v165
  %v171 = vmul.f32 %v144, %v154
  %v172 = vmul.f32 %v142, %v158
  %v173 = vmul.f32 %v140, %v162
  %v174 = vmul.f32 %v146, %v166
  %v175 = vmul.f32 %v145, %v154
  %v176 = vmul.f32 %v143, %v158
  %v177 = vmul.f32 %v141, %v162
  %v178 = vmul.f32 %v147, %v166
  %v179 = vadd.f32 %v115, %v171
  %v180 = vadd.f32 %v116, %v172
  %v181 = vadd.f32 %v117, %v173
  %v182 = vadd.f32 %v118, %v174
  %v183 = vadd.f32 %v119, %v175
  %v184 = vadd.f32 %v120, %v176
  %v185 = vadd.f32 %v121, %v177
  %v186 = vadd.f32 %v122, %v178
  %s187 = scalar_lea.vmem %s0, 192
  %v188 = vld [vmem:[%s187] sm:$0xff]
  %v189 = vld [vmem:[%s187 + $0x8] sm:$0xff]
  %v190 = vld [vmem:[%s187 + $0x10] sm:$0xff]
  %v191 = vld [vmem:[%s187 + $0x18] sm:$0xff]
  %v192 = vld [vmem:[%s187 + $0x20] sm:$0xff]
  %v193 = vld [vmem:[%s187 + $0x28] sm:$0xff]
  %v194 = vld [vmem:[%s187 + $0x30] sm:$0xff]
  %v195 = vld [vmem:[%s187 + $0x38] sm:$0xff]
  %s196 = scalar_lea.vmem %s1, 3
  %v197 = vld [vmem:[%s196] ss:$8 sm:$0xf]
  %v199 = vlaneseq
  %v200 = vshrl.u32 %v199, 7
  %v201 = vsub.s32 0, %v200
  %v202 = vrot.slane %v197, %v201
  %v203 = vlaneseq
  %v204 = vshrl.u32 %v203, 7
  %v205 = vsub.s32 1, %v204
  %v206 = vrot.slane %v197, %v205
  %v207 = vlaneseq
  %v208 = vshrl.u32 %v207, 7
  %v209 = vsub.s32 2, %v208
  %v210 = vrot.slane %v197, %v209
  %v211 = vlaneseq
  %v212 = vshrl.u32 %v211, 7
  %v213 = vsub.s32 3, %v212
  %v214 = vrot.slane %v197, %v213
  %v219 = vmul.f32 %v188, %v202
  %v220 = vmul.f32 %v189, %v206
  %v221 = vmul.f32 %v190, %v210
  %v222 = vmul.f32 %v191, %v214
  %v223 = vmul.f32 %v192, %v202
  %v224 = vmul.f32 %v193, %v206
  %v225 = vmul.f32 %v194, %v210
  %v226 = vmul.f32 %v195, %v214
  %v227 = vadd.f32 %v179, %v219
  %v228 = vadd.f32 %v180, %v220
  %v229 = vadd.f32 %v181, %v221
  %v230 = vadd.f32 %v182, %v222
  %v231 = vadd.f32 %v183, %v223
  %v232 = vadd.f32 %v184, %v224
  %v233 = vadd.f32 %v185, %v225
  %v234 = vadd.f32 %v186, %v226
  %s235 = scalar_lea.vmem %s0, 288
  %v236 = vld [vmem:[%s235] sm:$0xff]
  %v237 = vld [vmem:[%s235 + $0x8] sm:$0xff]
  %v238 = vld [vmem:[%s235 + $0x10] sm:$0xff]
  %v239 = vld [vmem:[%s235 + $0x18] sm:$0xff]
  %v240 = vld [vmem:[%s235 + $0x20] sm:$0xff]
  %v241 = vld [vmem:[%s235 + $0x28] sm:$0xff]
  %v242 = vld [vmem:[%s235 + $0x30] sm:$0xff]
  %v243 = vld [vmem:[%s235 + $0x38] sm:$0xff]
  %s244 = scalar_lea.vmem %s1, 4
  %v245 = vld [vmem:[%s244] ss:$8 sm:$0xf]
  %v247 = vlaneseq
  %v248 = vshrl.u32 %v247, 7
  %v249 = vsub.s32 0, %v248
  %v250 = vrot.slane %v245, %v249
  %v251 = vlaneseq
  %v252 = vshrl.u32 %v251, 7
  %v253 = vsub.s32 1, %v252
  %v254 = vrot.slane %v245, %v253
  %v255 = vlaneseq
  %v256 = vshrl.u32 %v255, 7
  %v257 = vsub.s32 2, %v256
  %v258 = vrot.slane %v245, %v257
  %v259 = vlaneseq
  %v260 = vshrl.u32 %v259, 7
  %v261 = vsub.s32 3, %v260
  %v262 = vrot.slane %v245, %v261
  %v267 = vmul.f32 %v236, %v250
  %v268 = vmul.f32 %v237, %v254
  %v269 = vmul.f32 %v238, %v258
  %v270 = vmul.f32 %v239, %v262
  %v271 = vmul.f32 %v240, %v250
  %v272 = vmul.f32 %v241, %v254
  %v273 = vmul.f32 %v242, %v258
  %v274 = vmul.f32 %v243, %v262
  %v275 = vadd.f32 %v227, %v267
  %v276 = vadd.f32 %v228, %v268
  %v277 = vadd.f32 %v229, %v269
  %v278 = vadd.f32 %v230, %v270
  %v279 = vadd.f32 %v231, %v271
  %v280 = vadd.f32 %v232, %v272
  %v281 = vadd.f32 %v233, %v273
  %v282 = vadd.f32 %v234, %v274
  %283 = vrot.lane.b32.xlu0 %v188, 96
  %v284 = vpop.permute.xlu0 %283
  %285 = vrot.lane.b32.xlu0 %v192, 96
  %v286 = vpop.permute.xlu0 %285
  %287 = vrot.lane.b32.xlu0 %v189, 96
  %v288 = vpop.permute.xlu0 %287
  %289 = vrot.lane.b32.xlu0 %v193, 96
  %v290 = vpop.permute.xlu0 %289
  %291 = vrot.lane.b32.xlu0 %v190, 96
  %v292 = vpop.permute.xlu0 %291
  %293 = vrot.lane.b32.xlu0 %v194, 96
  %v294 = vpop.permute.xlu0 %293
  %295 = vrot.lane.b32.xlu0 %v191, 96
  %v296 = vpop.permute.xlu0 %295
  %297 = vrot.lane.b32.xlu0 %v195, 96
  %v298 = vpop.permute.xlu0 %297
  %v299 = vsel %vm139, %v292, %v296
  %v300 = vsel %vm139, %v294, %v298
  %v301 = vsel %vm139, %v288, %v292
  %v302 = vsel %vm139, %v290, %v294
  %v303 = vsel %vm139, %v284, %v288
  %v304 = vsel %vm139, %v286, %v290
  %v305 = vsel %vm139, %v296, %v284
  %v306 = vsel %vm139, %v298, %v286
  %s307 = scalar_lea.vmem %s1, 5
  %v308 = vld [vmem:[%s307] ss:$8 sm:$0xf]
  %v310 = vlaneseq
  %v311 = vshrl.u32 %v310, 7
  %v312 = vsub.s32 0, %v311
  %v313 = vrot.slane %v308, %v312
  %v314 = vlaneseq
  %v315 = vshrl.u32 %v314, 7
  %v316 = vsub.s32 1, %v315
  %v317 = vrot.slane %v308, %v316
  %v318 = vlaneseq
  %v319 = vshrl.u32 %v318, 7
  %v320 = vsub.s32 2, %v319
  %v321 = vrot.slane %v308, %v320
  %v322 = vlaneseq
  %v323 = vshrl.u32 %v322, 7
  %v324 = vsub.s32 3, %v323
  %v325 = vrot.slane %v308, %v324
  %v330 = vmul.f32 %v303, %v313
  %v331 = vmul.f32 %v301, %v317
  %v332 = vmul.f32 %v299, %v321
  %v333 = vmul.f32 %v305, %v325
  %v334 = vmul.f32 %v304, %v313
  %v335 = vmul.f32 %v302, %v317
  %v336 = vmul.f32 %v300, %v321
  %v337 = vmul.f32 %v306, %v325
  %v338 = vadd.f32 %v275, %v330
  %v339 = vadd.f32 %v276, %v331
  %v340 = vadd.f32 %v277, %v332
  %v341 = vadd.f32 %v278, %v333
  %v342 = vadd.f32 %v279, %v334
  %v343 = vadd.f32 %v280, %v335
  %v344 = vadd.f32 %v281, %v336
  %v345 = vadd.f32 %v282, %v337
  %v346 = vld [vmem:[%s0] sm:$0xfe]
  %v347 = vld [vmem:[%s0 + $0x8] sm:$0xfe]
  %v348 = vld [vmem:[%s0 + $0x10] sm:$0xfe]
  %v349 = vld [vmem:[%s0 + $0x18] sm:$0xfe]
  %v350 = vld [vmem:[%s0 + $0x40] sm:$0x1]
  %v351 = vld [vmem:[%s0 + $0x48] sm:$0x1]
  %v352 = vld [vmem:[%s0 + $0x50] sm:$0x1]
  %v353 = vld [vmem:[%s0 + $0x58] sm:$0x1]
  %s354 = scalar_lea.vmem %s1, 6
  %v355 = vld [vmem:[%s354] ss:$8 sm:$0xf]
  %v357 = vlaneseq
  %v358 = vshrl.u32 %v357, 7
  %v359 = vsub.s32 0, %v358
  %v360 = vrot.slane %v355, %v359
  %v361 = vlaneseq
  %v362 = vshrl.u32 %v361, 7
  %v363 = vsub.s32 1, %v362
  %v364 = vrot.slane %v355, %v363
  %v365 = vlaneseq
  %v366 = vshrl.u32 %v365, 7
  %v367 = vsub.s32 2, %v366
  %v368 = vrot.slane %v355, %v367
  %v369 = vlaneseq
  %v370 = vshrl.u32 %v369, 7
  %v371 = vsub.s32 3, %v370
  %v372 = vrot.slane %v355, %v371
  %v377 = vmul.f32 %v346, %v360
  %v378 = vmul.f32 %v347, %v364
  %v379 = vmul.f32 %v348, %v368
  %v380 = vmul.f32 %v349, %v372
  %v381 = vmul.f32 %v41, %v360
  %v382 = vmul.f32 %v42, %v364
  %v383 = vmul.f32 %v43, %v368
  %v384 = vmul.f32 %v44, %v372
  %v385 = vmul.f32 %v350, %v360
  %v386 = vmul.f32 %v351, %v364
  %v387 = vmul.f32 %v352, %v368
  %v388 = vmul.f32 %v353, %v372
  %vm401 = vcmask 1046528
  %v402 = vrot.slane %v377, 1
  %v403 = vrot.slane %v381, 1
  %v404 = vsel %vm401, %v402, %v403
  %v405 = vrot.slane %v378, 1
  %v406 = vrot.slane %v382, 1
  %v407 = vsel %vm401, %v405, %v406
  %v408 = vrot.slane %v379, 1
  %v409 = vrot.slane %v383, 1
  %v410 = vsel %vm401, %v408, %v409
  %v411 = vrot.slane %v380, 1
  %v412 = vrot.slane %v384, 1
  %v413 = vsel %vm401, %v411, %v412
  %v414 = vrot.slane %v385, 1
  %v415 = vsel %vm401, %v403, %v414
  %v416 = vrot.slane %v386, 1
  %v417 = vsel %vm401, %v406, %v416
  %v418 = vrot.slane %v387, 1
  %v419 = vsel %vm401, %v409, %v418
  %v420 = vrot.slane %v388, 1
  %v421 = vsel %vm401, %v412, %v420
  %v430 = vadd.f32 %v338, %v404
  %v431 = vadd.f32 %v339, %v407
  %v432 = vadd.f32 %v340, %v410
  %v433 = vadd.f32 %v341, %v413
  %v434 = vadd.f32 %v342, %v415
  %v435 = vadd.f32 %v343, %v417
  %v436 = vadd.f32 %v344, %v419
  %v437 = vadd.f32 %v345, %v421
  %v438 = vld [vmem:[%s75] sm:$0xfe]
  %v439 = vld [vmem:[%s75 + $0x8] sm:$0xfe]
  %v440 = vld [vmem:[%s75 + $0x10] sm:$0xfe]
  %v441 = vld [vmem:[%s75 + $0x18] sm:$0xfe]
  %v442 = vld [vmem:[%s75 + $0x40] sm:$0x1]
  %v443 = vld [vmem:[%s75 + $0x48] sm:$0x1]
  %v444 = vld [vmem:[%s75 + $0x50] sm:$0x1]
  %v445 = vld [vmem:[%s75 + $0x58] sm:$0x1]
  %s446 = scalar_lea.vmem %s1, 7
  %v447 = vld [vmem:[%s446] ss:$8 sm:$0xf]
  %v449 = vlaneseq
  %v450 = vshrl.u32 %v449, 7
  %v451 = vsub.s32 0, %v450
  %v452 = vrot.slane %v447, %v451
  %v453 = vlaneseq
  %v454 = vshrl.u32 %v453, 7
  %v455 = vsub.s32 1, %v454
  %v456 = vrot.slane %v447, %v455
  %v457 = vlaneseq
  %v458 = vshrl.u32 %v457, 7
  %v459 = vsub.s32 2, %v458
  %v460 = vrot.slane %v447, %v459
  %v461 = vlaneseq
  %v462 = vshrl.u32 %v461, 7
  %v463 = vsub.s32 3, %v462
  %v464 = vrot.slane %v447, %v463
  %v469 = vmul.f32 %v438, %v452
  %v470 = vmul.f32 %v439, %v456
  %v471 = vmul.f32 %v440, %v460
  %v472 = vmul.f32 %v441, %v464
  %v473 = vmul.f32 %v80, %v452
  %v474 = vmul.f32 %v81, %v456
  %v475 = vmul.f32 %v82, %v460
  %v476 = vmul.f32 %v83, %v464
  %v477 = vmul.f32 %v442, %v452
  %v478 = vmul.f32 %v443, %v456
  %v479 = vmul.f32 %v444, %v460
  %v480 = vmul.f32 %v445, %v464
  %v493 = vrot.slane %v469, 1
  %v494 = vrot.slane %v473, 1
  %v495 = vsel %vm401, %v493, %v494
  %v496 = vrot.slane %v470, 1
  %v497 = vrot.slane %v474, 1
  %v498 = vsel %vm401, %v496, %v497
  %v499 = vrot.slane %v471, 1
  %v500 = vrot.slane %v475, 1
  %v501 = vsel %vm401, %v499, %v500
  %v502 = vrot.slane %v472, 1
  %v503 = vrot.slane %v476, 1
  %v504 = vsel %vm401, %v502, %v503
  %v505 = vrot.slane %v477, 1
  %v506 = vsel %vm401, %v494, %v505
  %v507 = vrot.slane %v478, 1
  %v508 = vsel %vm401, %v497, %v507
  %v509 = vrot.slane %v479, 1
  %v510 = vsel %vm401, %v500, %v509
  %v511 = vrot.slane %v480, 1
  %v512 = vsel %vm401, %v503, %v511
  %v521 = vadd.f32 %v430, %v495
  %v522 = vadd.f32 %v431, %v498
  %v523 = vadd.f32 %v432, %v501
  %v524 = vadd.f32 %v433, %v504
  %v525 = vadd.f32 %v434, %v506
  %v526 = vadd.f32 %v435, %v508
  %v527 = vadd.f32 %v436, %v510
  %v528 = vadd.f32 %v437, %v512
  %v541 = vrot.slane %v346, 1
  %v542 = vrot.slane %v41, 1
  %v543 = vsel %vm401, %v541, %v542
  %v544 = vrot.slane %v347, 1
  %v545 = vrot.slane %v42, 1
  %v546 = vsel %vm401, %v544, %v545
  %v547 = vrot.slane %v348, 1
  %v548 = vrot.slane %v43, 1
  %v549 = vsel %vm401, %v547, %v548
  %v550 = vrot.slane %v349, 1
  %v551 = vrot.slane %v44, 1
  %v552 = vsel %vm401, %v550, %v551
  %v553 = vrot.slane %v350, 1
  %v554 = vsel %vm401, %v542, %v553
  %v555 = vrot.slane %v351, 1
  %v556 = vsel %vm401, %v545, %v555
  %v557 = vrot.slane %v352, 1
  %v558 = vsel %vm401, %v548, %v557
  %v559 = vrot.slane %v353, 1
  %v560 = vsel %vm401, %v551, %v559
  %569 = vrot.lane.b32.xlu0 %v543, 96
  %v570 = vpop.permute.xlu0 %569
  %571 = vrot.lane.b32.xlu0 %v554, 96
  %v572 = vpop.permute.xlu0 %571
  %573 = vrot.lane.b32.xlu0 %v546, 96
  %v574 = vpop.permute.xlu0 %573
  %575 = vrot.lane.b32.xlu0 %v556, 96
  %v576 = vpop.permute.xlu0 %575
  %577 = vrot.lane.b32.xlu0 %v549, 96
  %v578 = vpop.permute.xlu0 %577
  %579 = vrot.lane.b32.xlu0 %v558, 96
  %v580 = vpop.permute.xlu0 %579
  %581 = vrot.lane.b32.xlu0 %v552, 96
  %v582 = vpop.permute.xlu0 %581
  %583 = vrot.lane.b32.xlu0 %v560, 96
  %v584 = vpop.permute.xlu0 %583
  %v585 = vsel %vm139, %v578, %v582
  %v586 = vsel %vm139, %v580, %v584
  %v587 = vsel %vm139, %v574, %v578
  %v588 = vsel %vm139, %v576, %v580
  %v589 = vsel %vm139, %v570, %v574
  %v590 = vsel %vm139, %v572, %v576
  %v591 = vsel %vm139, %v582, %v570
  %v592 = vsel %vm139, %v584, %v572
  %s593 = scalar_lea.vmem %s1, 32
  %v594 = vld [vmem:[%s593] ss:$8 sm:$0xf]
  %v596 = vlaneseq
  %v597 = vshrl.u32 %v596, 7
  %v598 = vsub.s32 0, %v597
  %v599 = vrot.slane %v594, %v598
  %v600 = vlaneseq
  %v601 = vshrl.u32 %v600, 7
  %v602 = vsub.s32 1, %v601
  %v603 = vrot.slane %v594, %v602
  %v604 = vlaneseq
  %v605 = vshrl.u32 %v604, 7
  %v606 = vsub.s32 2, %v605
  %v607 = vrot.slane %v594, %v606
  %v608 = vlaneseq
  %v609 = vshrl.u32 %v608, 7
  %v610 = vsub.s32 3, %v609
  %v611 = vrot.slane %v594, %v610
  %v616 = vmul.f32 %v589, %v599
  %v617 = vmul.f32 %v587, %v603
  %v618 = vmul.f32 %v585, %v607
  %v619 = vmul.f32 %v591, %v611
  %v620 = vmul.f32 %v590, %v599
  %v621 = vmul.f32 %v588, %v603
  %v622 = vmul.f32 %v586, %v607
  %v623 = vmul.f32 %v592, %v611
  %v624 = vadd.f32 %v521, %v616
  %v625 = vadd.f32 %v522, %v617
  %v626 = vadd.f32 %v523, %v618
  %v627 = vadd.f32 %v524, %v619
  %v628 = vadd.f32 %v525, %v620
  %v629 = vadd.f32 %v526, %v621
  %v630 = vadd.f32 %v527, %v622
  %v631 = vadd.f32 %v528, %v623
  %v633 = vlaneseq
  %v634 = vshrl.u32 %v633, 7
  %v635 = vsub.s32 0, %v634
  %v636 = vrot.slane %v36, %v635
  %v637 = vlaneseq
  %v638 = vshrl.u32 %v637, 7
  %v639 = vsub.s32 1, %v638
  %v640 = vrot.slane %v36, %v639
  %v641 = vlaneseq
  %v642 = vshrl.u32 %v641, 7
  %v643 = vsub.s32 2, %v642
  %v644 = vrot.slane %v36, %v643
  %v645 = vlaneseq
  %v646 = vshrl.u32 %v645, 7
  %v647 = vsub.s32 3, %v646
  %v648 = vrot.slane %v36, %v647
  %v653 = vadd.f32 %v624, %v636
  %v654 = vadd.f32 %v625, %v640
  %v655 = vadd.f32 %v626, %v644
  %v656 = vadd.f32 %v627, %v648
  %v657 = vadd.f32 %v628, %v636
  %v658 = vadd.f32 %v629, %v640
  %v659 = vadd.f32 %v630, %v644
  %v660 = vadd.f32 %v631, %v648
  %v661 = vmax.f32 %v653, 0.0
  %v662 = vmax.f32 %v654, 0.0
  %v663 = vmax.f32 %v655, 0.0
  %v664 = vmax.f32 %v656, 0.0
  %v665 = vmax.f32 %v657, 0.0
  %v666 = vmax.f32 %v658, 0.0
  %v667 = vmax.f32 %v659, 0.0
  %v668 = vmax.f32 %v660, 0.0
  %v669 = vmul.f32 %v661, 24.0
  %v670 = vmul.f32 %v662, 24.0
  %v671 = vmul.f32 %v663, 24.0
  %v672 = vmul.f32 %v664, 24.0
  %v673 = vmul.f32 %v665, 24.0
  %v674 = vmul.f32 %v666, 24.0
  %v675 = vmul.f32 %v667, 24.0
  %v676 = vmul.f32 %v668, 24.0
  %v677 = vsel %vm28, %v669, 0.0
  %v678 = vsel %vm29, %v670, 0.0
  %v679 = vsel %vm30, %v671, 0.0
  %v680 = vsel %vm31, %v672, 0.0
  %v681 = vsel %vm32, %v673, 0.0
  %v682 = vsel %vm33, %v674, 0.0
  %v683 = vsel %vm34, %v675, 0.0
  %v684 = vsel %vm35, %v676, 0.0
  %685 = vrot.lane.b32.xlu0 %v677, 32
  %v686 = vpop.permute.xlu0 %685
  %687 = vrot.lane.b32.xlu0 %v681, 32
  %v688 = vpop.permute.xlu0 %687
  %689 = vrot.lane.b32.xlu0 %v678, 32
  %v690 = vpop.permute.xlu0 %689
  %691 = vrot.lane.b32.xlu0 %v682, 32
  %v692 = vpop.permute.xlu0 %691
  %693 = vrot.lane.b32.xlu0 %v679, 32
  %v694 = vpop.permute.xlu0 %693
  %695 = vrot.lane.b32.xlu0 %v683, 32
  %v696 = vpop.permute.xlu0 %695
  %697 = vrot.lane.b32.xlu0 %v680, 32
  %v698 = vpop.permute.xlu0 %697
  %699 = vrot.lane.b32.xlu0 %v684, 32
  %v700 = vpop.permute.xlu0 %699
  %vm701 = vcmp.lt.s32.totalorder %v18, 32
  %v702 = vsel %vm701, %v694, %v698
  %v703 = vsel %vm701, %v696, %v700
  %v704 = vsel %vm701, %v690, %v694
  %v705 = vsel %vm701, %v692, %v696
  %v706 = vsel %vm701, %v686, %v690
  %v707 = vsel %vm701, %v688, %v692
  %v708 = vsel %vm701, %v698, %v686
  %v709 = vsel %vm701, %v700, %v688
  %710 = vrot.lane.b32.xlu0 %v677, 96
  %v711 = vpop.permute.xlu0 %710
  %712 = vrot.lane.b32.xlu0 %v681, 96
  %v713 = vpop.permute.xlu0 %712
  %714 = vrot.lane.b32.xlu0 %v678, 96
  %v715 = vpop.permute.xlu0 %714
  %716 = vrot.lane.b32.xlu0 %v682, 96
  %v717 = vpop.permute.xlu0 %716
  %718 = vrot.lane.b32.xlu0 %v679, 96
  %v719 = vpop.permute.xlu0 %718
  %720 = vrot.lane.b32.xlu0 %v683, 96
  %v721 = vpop.permute.xlu0 %720
  %722 = vrot.lane.b32.xlu0 %v680, 96
  %v723 = vpop.permute.xlu0 %722
  %724 = vrot.lane.b32.xlu0 %v684, 96
  %v725 = vpop.permute.xlu0 %724
  %v726 = vsel %vm139, %v719, %v723
  %v727 = vsel %vm139, %v721, %v725
  %v728 = vsel %vm139, %v715, %v719
  %v729 = vsel %vm139, %v717, %v721
  %v730 = vsel %vm139, %v711, %v715
  %v731 = vsel %vm139, %v713, %v717
  %v732 = vsel %vm139, %v723, %v711
  %v733 = vsel %vm139, %v725, %v713
  %v734 = vmul.f32 %v708, %v50
  %v735 = vmul.f32 %v706, %v54
  %v736 = vmul.f32 %v704, %v58
  %v737 = vmul.f32 %v702, %v62
  %v738 = vmul.f32 %v709, %v50
  %v739 = vmul.f32 %v707, %v54
  %v740 = vmul.f32 %v705, %v58
  %v741 = vmul.f32 %v703, %v62
  %v742 = vmul.f32 %v677, %v90
  %v743 = vmul.f32 %v678, %v94
  %v744 = vmul.f32 %v679, %v98
  %v745 = vmul.f32 %v680, %v102
  %v746 = vmul.f32 %v681, %v90
  %v747 = vmul.f32 %v682, %v94
  %v748 = vmul.f32 %v683, %v98
  %v749 = vmul.f32 %v684, %v102
  %v750 = vadd.f32 %v734, %v742
  %v751 = vadd.f32 %v735, %v743
  %v752 = vadd.f32 %v736, %v744
  %v753 = vadd.f32 %v737, %v745
  %v754 = vadd.f32 %v738, %v746
  %v755 = vadd.f32 %v739, %v747
  %v756 = vadd.f32 %v740, %v748
  %v757 = vadd.f32 %v741, %v749
  %v758 = vmul.f32 %v730, %v154
  %v759 = vmul.f32 %v728, %v158
  %v760 = vmul.f32 %v726, %v162
  %v761 = vmul.f32 %v732, %v166
  %v762 = vmul.f32 %v731, %v154
  %v763 = vmul.f32 %v729, %v158
  %v764 = vmul.f32 %v727, %v162
  %v765 = vmul.f32 %v733, %v166
  %v766 = vadd.f32 %v750, %v758
  %v767 = vadd.f32 %v751, %v759
  %v768 = vadd.f32 %v752, %v760
  %v769 = vadd.f32 %v753, %v761
  %v770 = vadd.f32 %v754, %v762
  %v771 = vadd.f32 %v755, %v763
  %v772 = vadd.f32 %v756, %v764
  %v773 = vadd.f32 %v757, %v765
  %v774 = vrot.slane %v766, 7
  %v775 = vrot.slane %v767, 7
  %v776 = vrot.slane %v768, 7
  %v777 = vrot.slane %v769, 7
  %v778 = vrot.slane %v770, 7
  %v779 = vrot.slane %v771, 7
  %v780 = vrot.slane %v772, 7
  %v781 = vrot.slane %v773, 7
  %vm782 = vcmp.lt.s32.totalorder %v15, 1
  %v783 = vsel %vm782, %v774, %v778
  %v784 = vsel %vm782, %v775, %v779
  %v785 = vsel %vm782, %v776, %v780
  %v786 = vsel %vm782, %v777, %v781
  %v787 = vsel %vm782, %v778, %v774
  %v788 = vsel %vm782, %v779, %v775
  %v789 = vsel %vm782, %v780, %v776
  %v790 = vsel %vm782, %v781, %v777
  %v791 = vmul.f32 %v708, %v202
  %v792 = vmul.f32 %v706, %v206
  %v793 = vmul.f32 %v704, %v210
  %v794 = vmul.f32 %v702, %v214
  %v795 = vmul.f32 %v709, %v202
  %v796 = vmul.f32 %v707, %v206
  %v797 = vmul.f32 %v705, %v210
  %v798 = vmul.f32 %v703, %v214
  %v799 = vmul.f32 %v677, %v250
  %v800 = vmul.f32 %v678, %v254
  %v801 = vmul.f32 %v679, %v258
  %v802 = vmul.f32 %v680, %v262
  %v803 = vmul.f32 %v681, %v250
  %v804 = vmul.f32 %v682, %v254
  %v805 = vmul.f32 %v683, %v258
  %v806 = vmul.f32 %v684, %v262
  %v807 = vadd.f32 %v791, %v799
  %v808 = vadd.f32 %v792, %v800
  %v809 = vadd.f32 %v793, %v801
  %v810 = vadd.f32 %v794, %v802
  %v811 = vadd.f32 %v795, %v803
  %v812 = vadd.f32 %v796, %v804
  %v813 = vadd.f32 %v797, %v805
  %v814 = vadd.f32 %v798, %v806
  %v815 = vmul.f32 %v730, %v313
  %v816 = vmul.f32 %v728, %v317
  %v817 = vmul.f32 %v726, %v321
  %v818 = vmul.f32 %v732, %v325
  %v819 = vmul.f32 %v731, %v313
  %v820 = vmul.f32 %v729, %v317
  %v821 = vmul.f32 %v727, %v321
  %v822 = vmul.f32 %v733, %v325
  %v823 = vadd.f32 %v807, %v815
  %v824 = vadd.f32 %v808, %v816
  %v825 = vadd.f32 %v809, %v817
  %v826 = vadd.f32 %v810, %v818
  %v827 = vadd.f32 %v811, %v819
  %v828 = vadd.f32 %v812, %v820
  %v829 = vadd.f32 %v813, %v821
  %v830 = vadd.f32 %v814, %v822
  %v831 = vadd.f32 %v787, %v823
  %v832 = vadd.f32 %v788, %v824
  %v833 = vadd.f32 %v789, %v825
  %v834 = vadd.f32 %v790, %v826
  %v835 = vadd.f32 %v783, %v827
  %v836 = vadd.f32 %v784, %v828
  %v837 = vadd.f32 %v785, %v829
  %v838 = vadd.f32 %v786, %v830
  %v839 = vmul.f32 %v708, %v360
  %v840 = vmul.f32 %v706, %v364
  %v841 = vmul.f32 %v704, %v368
  %v842 = vmul.f32 %v702, %v372
  %v843 = vmul.f32 %v709, %v360
  %v844 = vmul.f32 %v707, %v364
  %v845 = vmul.f32 %v705, %v368
  %v846 = vmul.f32 %v703, %v372
  %v847 = vmul.f32 %v677, %v452
  %v848 = vmul.f32 %v678, %v456
  %v849 = vmul.f32 %v679, %v460
  %v850 = vmul.f32 %v680, %v464
  %v851 = vmul.f32 %v681, %v452
  %v852 = vmul.f32 %v682, %v456
  %v853 = vmul.f32 %v683, %v460
  %v854 = vmul.f32 %v684, %v464
  %v855 = vadd.f32 %v839, %v847
  %v856 = vadd.f32 %v840, %v848
  %v857 = vadd.f32 %v841, %v849
  %v858 = vadd.f32 %v842, %v850
  %v859 = vadd.f32 %v843, %v851
  %v860 = vadd.f32 %v844, %v852
  %v861 = vadd.f32 %v845, %v853
  %v862 = vadd.f32 %v846, %v854
  %v863 = vmul.f32 %v730, %v599
  %v864 = vmul.f32 %v728, %v603
  %v865 = vmul.f32 %v726, %v607
  %v866 = vmul.f32 %v732, %v611
  %v867 = vmul.f32 %v731, %v599
  %v868 = vmul.f32 %v729, %v603
  %v869 = vmul.f32 %v727, %v607
  %v870 = vmul.f32 %v733, %v611
  %v871 = vadd.f32 %v855, %v863
  %v872 = vadd.f32 %v856, %v864
  %v873 = vadd.f32 %v857, %v865
  %v874 = vadd.f32 %v858, %v866
  %v875 = vadd.f32 %v859, %v867
  %v876 = vadd.f32 %v860, %v868
  %v877 = vadd.f32 %v861, %v869
  %v878 = vadd.f32 %v862, %v870
  %v879 = vrot.slane %v871, 1
  %v880 = vrot.slane %v872, 1
  %v881 = vrot.slane %v873, 1
  %v882 = vrot.slane %v874, 1
  %v883 = vrot.slane %v875, 1
  %v884 = vrot.slane %v876, 1
  %v885 = vrot.slane %v877, 1
  %v886 = vrot.slane %v878, 1
  %vm887 = vcmp.lt.s32.totalorder %v15, 7
  %v888 = vsel %vm887, %v879, %v883
  %v889 = vsel %vm887, %v880, %v884
  %v890 = vsel %vm887, %v881, %v885
  %v891 = vsel %vm887, %v882, %v886
  %v892 = vsel %vm887, %v883, %v879
  %v893 = vsel %vm887, %v884, %v880
  %v894 = vsel %vm887, %v885, %v881
  %v895 = vsel %vm887, %v886, %v882
  %v896 = vadd.f32 %v831, %v888
  %v897 = vadd.f32 %v832, %v889
  %v898 = vadd.f32 %v833, %v890
  %v899 = vadd.f32 %v834, %v891
  %v900 = vadd.f32 %v835, %v892
  %v901 = vadd.f32 %v836, %v893
  %v902 = vadd.f32 %v837, %v894
  %v903 = vadd.f32 %v838, %v895
  %v904 = vadd.f32 %v896, %v636
  %v905 = vadd.f32 %v897, %v640
  %v906 = vadd.f32 %v898, %v644
  %v907 = vadd.f32 %v899, %v648
  %v908 = vadd.f32 %v900, %v636
  %v909 = vadd.f32 %v901, %v640
  %v910 = vadd.f32 %v902, %v644
  %v911 = vadd.f32 %v903, %v648
  %v912 = vsel %vm28, %v904, 0.0
  %v913 = vsel %vm29, %v905, 0.0
  %v914 = vsel %vm30, %v906, 0.0
  %v915 = vsel %vm31, %v907, 0.0
  %v916 = vsel %vm32, %v908, 0.0
  %v917 = vsel %vm33, %v909, 0.0
  %v918 = vsel %vm34, %v910, 0.0
  %v919 = vsel %vm35, %v911, 0.0
  %v920 = vadd.f32 %v677, %v912
  %v921 = vadd.f32 %v678, %v913
  %v922 = vadd.f32 %v679, %v914
  %v923 = vadd.f32 %v680, %v915
  %v924 = vadd.f32 %v681, %v916
  %v925 = vadd.f32 %v682, %v917
  %v926 = vadd.f32 %v683, %v918
  %v927 = vadd.f32 %v684, %v919
  %928 = vrot.lane.b32.xlu0 %v912, 32
  %v929 = vpop.permute.xlu0 %928
  %930 = vrot.lane.b32.xlu0 %v916, 32
  %v931 = vpop.permute.xlu0 %930
  %932 = vrot.lane.b32.xlu0 %v913, 32
  %v933 = vpop.permute.xlu0 %932
  %934 = vrot.lane.b32.xlu0 %v917, 32
  %v935 = vpop.permute.xlu0 %934
  %936 = vrot.lane.b32.xlu0 %v914, 32
  %v937 = vpop.permute.xlu0 %936
  %938 = vrot.lane.b32.xlu0 %v918, 32
  %v939 = vpop.permute.xlu0 %938
  %940 = vrot.lane.b32.xlu0 %v915, 32
  %v941 = vpop.permute.xlu0 %940
  %942 = vrot.lane.b32.xlu0 %v919, 32
  %v943 = vpop.permute.xlu0 %942
  %v944 = vsel %vm701, %v937, %v941
  %v945 = vsel %vm701, %v939, %v943
  %v946 = vsel %vm701, %v933, %v937
  %v947 = vsel %vm701, %v935, %v939
  %v948 = vsel %vm701, %v929, %v933
  %v949 = vsel %vm701, %v931, %v935
  %v950 = vsel %vm701, %v941, %v929
  %v951 = vsel %vm701, %v943, %v931
  %952 = vrot.lane.b32.xlu0 %v912, 96
  %v953 = vpop.permute.xlu0 %952
  %954 = vrot.lane.b32.xlu0 %v916, 96
  %v955 = vpop.permute.xlu0 %954
  %956 = vrot.lane.b32.xlu0 %v913, 96
  %v957 = vpop.permute.xlu0 %956
  %958 = vrot.lane.b32.xlu0 %v917, 96
  %v959 = vpop.permute.xlu0 %958
  %960 = vrot.lane.b32.xlu0 %v914, 96
  %v961 = vpop.permute.xlu0 %960
  %962 = vrot.lane.b32.xlu0 %v918, 96
  %v963 = vpop.permute.xlu0 %962
  %964 = vrot.lane.b32.xlu0 %v915, 96
  %v965 = vpop.permute.xlu0 %964
  %966 = vrot.lane.b32.xlu0 %v919, 96
  %v967 = vpop.permute.xlu0 %966
  %v968 = vsel %vm139, %v961, %v965
  %v969 = vsel %vm139, %v963, %v967
  %v970 = vsel %vm139, %v957, %v961
  %v971 = vsel %vm139, %v959, %v963
  %v972 = vsel %vm139, %v953, %v957
  %v973 = vsel %vm139, %v955, %v959
  %v974 = vsel %vm139, %v965, %v953
  %v975 = vsel %vm139, %v967, %v955
  %v976 = vmul.f32 %v950, %v50
  %v977 = vmul.f32 %v948, %v54
  %v978 = vmul.f32 %v946, %v58
  %v979 = vmul.f32 %v944, %v62
  %v980 = vmul.f32 %v951, %v50
  %v981 = vmul.f32 %v949, %v54
  %v982 = vmul.f32 %v947, %v58
  %v983 = vmul.f32 %v945, %v62
  %v984 = vmul.f32 %v912, %v90
  %v985 = vmul.f32 %v913, %v94
  %v986 = vmul.f32 %v914, %v98
  %v987 = vmul.f32 %v915, %v102
  %v988 = vmul.f32 %v916, %v90
  %v989 = vmul.f32 %v917, %v94
  %v990 = vmul.f32 %v918, %v98
  %v991 = vmul.f32 %v919, %v102
  %v992 = vadd.f32 %v976, %v984
  %v993 = vadd.f32 %v977, %v985
  %v994 = vadd.f32 %v978, %v986
  %v995 = vadd.f32 %v979, %v987
  %v996 = vadd.f32 %v980, %v988
  %v997 = vadd.f32 %v981, %v989
  %v998 = vadd.f32 %v982, %v990
  %v999 = vadd.f32 %v983, %v991
  %v1000 = vmul.f32 %v972, %v154
  %v1001 = vmul.f32 %v970, %v158
  %v1002 = vmul.f32 %v968, %v162
  %v1003 = vmul.f32 %v974, %v166
  %v1004 = vmul.f32 %v973, %v154
  %v1005 = vmul.f32 %v971, %v158
  %v1006 = vmul.f32 %v969, %v162
  %v1007 = vmul.f32 %v975, %v166
  %v1008 = vadd.f32 %v992, %v1000
  %v1009 = vadd.f32 %v993, %v1001
  %v1010 = vadd.f32 %v994, %v1002
  %v1011 = vadd.f32 %v995, %v1003
  %v1012 = vadd.f32 %v996, %v1004
  %v1013 = vadd.f32 %v997, %v1005
  %v1014 = vadd.f32 %v998, %v1006
  %v1015 = vadd.f32 %v999, %v1007
  %v1016 = vrot.slane %v1008, 7
  %v1017 = vrot.slane %v1009, 7
  %v1018 = vrot.slane %v1010, 7
  %v1019 = vrot.slane %v1011, 7
  %v1020 = vrot.slane %v1012, 7
  %v1021 = vrot.slane %v1013, 7
  %v1022 = vrot.slane %v1014, 7
  %v1023 = vrot.slane %v1015, 7
  %v1024 = vsel %vm782, %v1016, %v1020
  %v1025 = vsel %vm782, %v1017, %v1021
  %v1026 = vsel %vm782, %v1018, %v1022
  %v1027 = vsel %vm782, %v1019, %v1023
  %v1028 = vsel %vm782, %v1020, %v1016
  %v1029 = vsel %vm782, %v1021, %v1017
  %v1030 = vsel %vm782, %v1022, %v1018
  %v1031 = vsel %vm782, %v1023, %v1019
  %v1032 = vmul.f32 %v950, %v202
  %v1033 = vmul.f32 %v948, %v206
  %v1034 = vmul.f32 %v946, %v210
  %v1035 = vmul.f32 %v944, %v214
  %v1036 = vmul.f32 %v951, %v202
  %v1037 = vmul.f32 %v949, %v206
  %v1038 = vmul.f32 %v947, %v210
  %v1039 = vmul.f32 %v945, %v214
  %v1040 = vmul.f32 %v912, %v250
  %v1041 = vmul.f32 %v913, %v254
  %v1042 = vmul.f32 %v914, %v258
  %v1043 = vmul.f32 %v915, %v262
  %v1044 = vmul.f32 %v916, %v250
  %v1045 = vmul.f32 %v917, %v254
  %v1046 = vmul.f32 %v918, %v258
  %v1047 = vmul.f32 %v919, %v262
  %v1048 = vadd.f32 %v1032, %v1040
  %v1049 = vadd.f32 %v1033, %v1041
  %v1050 = vadd.f32 %v1034, %v1042
  %v1051 = vadd.f32 %v1035, %v1043
  %v1052 = vadd.f32 %v1036, %v1044
  %v1053 = vadd.f32 %v1037, %v1045
  %v1054 = vadd.f32 %v1038, %v1046
  %v1055 = vadd.f32 %v1039, %v1047
  %v1056 = vmul.f32 %v972, %v313
  %v1057 = vmul.f32 %v970, %v317
  %v1058 = vmul.f32 %v968, %v321
  %v1059 = vmul.f32 %v974, %v325
  %v1060 = vmul.f32 %v973, %v313
  %v1061 = vmul.f32 %v971, %v317
  %v1062 = vmul.f32 %v969, %v321
  %v1063 = vmul.f32 %v975, %v325
  %v1064 = vadd.f32 %v1048, %v1056
  %v1065 = vadd.f32 %v1049, %v1057
  %v1066 = vadd.f32 %v1050, %v1058
  %v1067 = vadd.f32 %v1051, %v1059
  %v1068 = vadd.f32 %v1052, %v1060
  %v1069 = vadd.f32 %v1053, %v1061
  %v1070 = vadd.f32 %v1054, %v1062
  %v1071 = vadd.f32 %v1055, %v1063
  %v1072 = vadd.f32 %v1028, %v1064
  %v1073 = vadd.f32 %v1029, %v1065
  %v1074 = vadd.f32 %v1030, %v1066
  %v1075 = vadd.f32 %v1031, %v1067
  %v1076 = vadd.f32 %v1024, %v1068
  %v1077 = vadd.f32 %v1025, %v1069
  %v1078 = vadd.f32 %v1026, %v1070
  %v1079 = vadd.f32 %v1027, %v1071
  %v1080 = vmul.f32 %v950, %v360
  %v1081 = vmul.f32 %v948, %v364
  %v1082 = vmul.f32 %v946, %v368
  %v1083 = vmul.f32 %v944, %v372
  %v1084 = vmul.f32 %v951, %v360
  %v1085 = vmul.f32 %v949, %v364
  %v1086 = vmul.f32 %v947, %v368
  %v1087 = vmul.f32 %v945, %v372
  %v1088 = vmul.f32 %v912, %v452
  %v1089 = vmul.f32 %v913, %v456
  %v1090 = vmul.f32 %v914, %v460
  %v1091 = vmul.f32 %v915, %v464
  %v1092 = vmul.f32 %v916, %v452
  %v1093 = vmul.f32 %v917, %v456
  %v1094 = vmul.f32 %v918, %v460
  %v1095 = vmul.f32 %v919, %v464
  %v1096 = vadd.f32 %v1080, %v1088
  %v1097 = vadd.f32 %v1081, %v1089
  %v1098 = vadd.f32 %v1082, %v1090
  %v1099 = vadd.f32 %v1083, %v1091
  %v1100 = vadd.f32 %v1084, %v1092
  %v1101 = vadd.f32 %v1085, %v1093
  %v1102 = vadd.f32 %v1086, %v1094
  %v1103 = vadd.f32 %v1087, %v1095
  %v1104 = vmul.f32 %v972, %v599
  %v1105 = vmul.f32 %v970, %v603
  %v1106 = vmul.f32 %v968, %v607
  %v1107 = vmul.f32 %v974, %v611
  %v1108 = vmul.f32 %v973, %v599
  %v1109 = vmul.f32 %v971, %v603
  %v1110 = vmul.f32 %v969, %v607
  %v1111 = vmul.f32 %v975, %v611
  %v1112 = vadd.f32 %v1096, %v1104
  %v1113 = vadd.f32 %v1097, %v1105
  %v1114 = vadd.f32 %v1098, %v1106
  %v1115 = vadd.f32 %v1099, %v1107
  %v1116 = vadd.f32 %v1100, %v1108
  %v1117 = vadd.f32 %v1101, %v1109
  %v1118 = vadd.f32 %v1102, %v1110
  %v1119 = vadd.f32 %v1103, %v1111
  %v1120 = vrot.slane %v1112, 1
  %v1121 = vrot.slane %v1113, 1
  %v1122 = vrot.slane %v1114, 1
  %v1123 = vrot.slane %v1115, 1
  %v1124 = vrot.slane %v1116, 1
  %v1125 = vrot.slane %v1117, 1
  %v1126 = vrot.slane %v1118, 1
  %v1127 = vrot.slane %v1119, 1
  %v1128 = vsel %vm887, %v1120, %v1124
  %v1129 = vsel %vm887, %v1121, %v1125
  %v1130 = vsel %vm887, %v1122, %v1126
  %v1131 = vsel %vm887, %v1123, %v1127
  %v1132 = vsel %vm887, %v1124, %v1120
  %v1133 = vsel %vm887, %v1125, %v1121
  %v1134 = vsel %vm887, %v1126, %v1122
  %v1135 = vsel %vm887, %v1127, %v1123
  %v1136 = vadd.f32 %v1072, %v1128
  %v1137 = vadd.f32 %v1073, %v1129
  %v1138 = vadd.f32 %v1074, %v1130
  %v1139 = vadd.f32 %v1075, %v1131
  %v1140 = vadd.f32 %v1076, %v1132
  %v1141 = vadd.f32 %v1077, %v1133
  %v1142 = vadd.f32 %v1078, %v1134
  %v1143 = vadd.f32 %v1079, %v1135
  %v1144 = vadd.f32 %v1136, %v636
  %v1145 = vadd.f32 %v1137, %v640
  %v1146 = vadd.f32 %v1138, %v644
  %v1147 = vadd.f32 %v1139, %v648
  %v1148 = vadd.f32 %v1140, %v636
  %v1149 = vadd.f32 %v1141, %v640
  %v1150 = vadd.f32 %v1142, %v644
  %v1151 = vadd.f32 %v1143, %v648
  %v1152 = vsel %vm28, %v1144, 0.0
  %v1153 = vsel %vm29, %v1145, 0.0
  %v1154 = vsel %vm30, %v1146, 0.0
  %v1155 = vsel %vm31, %v1147, 0.0
  %v1156 = vsel %vm32, %v1148, 0.0
  %v1157 = vsel %vm33, %v1149, 0.0
  %v1158 = vsel %vm34, %v1150, 0.0
  %v1159 = vsel %vm35, %v1151, 0.0
  %v1160 = vadd.f32 %v920, %v1152
  %v1161 = vadd.f32 %v921, %v1153
  %v1162 = vadd.f32 %v922, %v1154
  %v1163 = vadd.f32 %v923, %v1155
  %v1164 = vadd.f32 %v924, %v1156
  %v1165 = vadd.f32 %v925, %v1157
  %v1166 = vadd.f32 %v926, %v1158
  %v1167 = vadd.f32 %v927, %v1159
  %1168 = vrot.lane.b32.xlu0 %v1152, 32
  %v1169 = vpop.permute.xlu0 %1168
  %1170 = vrot.lane.b32.xlu0 %v1156, 32
  %v1171 = vpop.permute.xlu0 %1170
  %1172 = vrot.lane.b32.xlu0 %v1153, 32
  %v1173 = vpop.permute.xlu0 %1172
  %1174 = vrot.lane.b32.xlu0 %v1157, 32
  %v1175 = vpop.permute.xlu0 %1174
  %1176 = vrot.lane.b32.xlu0 %v1154, 32
  %v1177 = vpop.permute.xlu0 %1176
  %1178 = vrot.lane.b32.xlu0 %v1158, 32
  %v1179 = vpop.permute.xlu0 %1178
  %1180 = vrot.lane.b32.xlu0 %v1155, 32
  %v1181 = vpop.permute.xlu0 %1180
  %1182 = vrot.lane.b32.xlu0 %v1159, 32
  %v1183 = vpop.permute.xlu0 %1182
  %v1184 = vsel %vm701, %v1177, %v1181
  %v1185 = vsel %vm701, %v1179, %v1183
  %v1186 = vsel %vm701, %v1173, %v1177
  %v1187 = vsel %vm701, %v1175, %v1179
  %v1188 = vsel %vm701, %v1169, %v1173
  %v1189 = vsel %vm701, %v1171, %v1175
  %v1190 = vsel %vm701, %v1181, %v1169
  %v1191 = vsel %vm701, %v1183, %v1171
  %1192 = vrot.lane.b32.xlu0 %v1152, 96
  %v1193 = vpop.permute.xlu0 %1192
  %1194 = vrot.lane.b32.xlu0 %v1156, 96
  %v1195 = vpop.permute.xlu0 %1194
  %1196 = vrot.lane.b32.xlu0 %v1153, 96
  %v1197 = vpop.permute.xlu0 %1196
  %1198 = vrot.lane.b32.xlu0 %v1157, 96
  %v1199 = vpop.permute.xlu0 %1198
  %1200 = vrot.lane.b32.xlu0 %v1154, 96
  %v1201 = vpop.permute.xlu0 %1200
  %1202 = vrot.lane.b32.xlu0 %v1158, 96
  %v1203 = vpop.permute.xlu0 %1202
  %1204 = vrot.lane.b32.xlu0 %v1155, 96
  %v1205 = vpop.permute.xlu0 %1204
  %1206 = vrot.lane.b32.xlu0 %v1159, 96
  %v1207 = vpop.permute.xlu0 %1206
  %v1208 = vsel %vm139, %v1201, %v1205
  %v1209 = vsel %vm139, %v1203, %v1207
  %v1210 = vsel %vm139, %v1197, %v1201
  %v1211 = vsel %vm139, %v1199, %v1203
  %v1212 = vsel %vm139, %v1193, %v1197
  %v1213 = vsel %vm139, %v1195, %v1199
  %v1214 = vsel %vm139, %v1205, %v1193
  %v1215 = vsel %vm139, %v1207, %v1195
  %v1216 = vmul.f32 %v1190, %v50
  %v1217 = vmul.f32 %v1188, %v54
  %v1218 = vmul.f32 %v1186, %v58
  %v1219 = vmul.f32 %v1184, %v62
  %v1220 = vmul.f32 %v1191, %v50
  %v1221 = vmul.f32 %v1189, %v54
  %v1222 = vmul.f32 %v1187, %v58
  %v1223 = vmul.f32 %v1185, %v62
  %v1224 = vmul.f32 %v1152, %v90
  %v1225 = vmul.f32 %v1153, %v94
  %v1226 = vmul.f32 %v1154, %v98
  %v1227 = vmul.f32 %v1155, %v102
  %v1228 = vmul.f32 %v1156, %v90
  %v1229 = vmul.f32 %v1157, %v94
  %v1230 = vmul.f32 %v1158, %v98
  %v1231 = vmul.f32 %v1159, %v102
  %v1232 = vadd.f32 %v1216, %v1224
  %v1233 = vadd.f32 %v1217, %v1225
  %v1234 = vadd.f32 %v1218, %v1226
  %v1235 = vadd.f32 %v1219, %v1227
  %v1236 = vadd.f32 %v1220, %v1228
  %v1237 = vadd.f32 %v1221, %v1229
  %v1238 = vadd.f32 %v1222, %v1230
  %v1239 = vadd.f32 %v1223, %v1231
  %v1240 = vmul.f32 %v1212, %v154
  %v1241 = vmul.f32 %v1210, %v158
  %v1242 = vmul.f32 %v1208, %v162
  %v1243 = vmul.f32 %v1214, %v166
  %v1244 = vmul.f32 %v1213, %v154
  %v1245 = vmul.f32 %v1211, %v158
  %v1246 = vmul.f32 %v1209, %v162
  %v1247 = vmul.f32 %v1215, %v166
  %v1248 = vadd.f32 %v1232, %v1240
  %v1249 = vadd.f32 %v1233, %v1241
  %v1250 = vadd.f32 %v1234, %v1242
  %v1251 = vadd.f32 %v1235, %v1243
  %v1252 = vadd.f32 %v1236, %v1244
  %v1253 = vadd.f32 %v1237, %v1245
  %v1254 = vadd.f32 %v1238, %v1246
  %v1255 = vadd.f32 %v1239, %v1247
  %v1256 = vrot.slane %v1248, 7
  %v1257 = vrot.slane %v1249, 7
  %v1258 = vrot.slane %v1250, 7
  %v1259 = vrot.slane %v1251, 7
  %v1260 = vrot.slane %v1252, 7
  %v1261 = vrot.slane %v1253, 7
  %v1262 = vrot.slane %v1254, 7
  %v1263 = vrot.slane %v1255, 7
  %v1264 = vsel %vm782, %v1256, %v1260
  %v1265 = vsel %vm782, %v1257, %v1261
  %v1266 = vsel %vm782, %v1258, %v1262
  %v1267 = vsel %vm782, %v1259, %v1263
  %v1268 = vsel %vm782, %v1260, %v1256
  %v1269 = vsel %vm782, %v1261, %v1257
  %v1270 = vsel %vm782, %v1262, %v1258
  %v1271 = vsel %vm782, %v1263, %v1259
  %v1272 = vmul.f32 %v1190, %v202
  %v1273 = vmul.f32 %v1188, %v206
  %v1274 = vmul.f32 %v1186, %v210
  %v1275 = vmul.f32 %v1184, %v214
  %v1276 = vmul.f32 %v1191, %v202
  %v1277 = vmul.f32 %v1189, %v206
  %v1278 = vmul.f32 %v1187, %v210
  %v1279 = vmul.f32 %v1185, %v214
  %v1280 = vmul.f32 %v1152, %v250
  %v1281 = vmul.f32 %v1153, %v254
  %v1282 = vmul.f32 %v1154, %v258
  %v1283 = vmul.f32 %v1155, %v262
  %v1284 = vmul.f32 %v1156, %v250
  %v1285 = vmul.f32 %v1157, %v254
  %v1286 = vmul.f32 %v1158, %v258
  %v1287 = vmul.f32 %v1159, %v262
  %v1288 = vadd.f32 %v1272, %v1280
  %v1289 = vadd.f32 %v1273, %v1281
  %v1290 = vadd.f32 %v1274, %v1282
  %v1291 = vadd.f32 %v1275, %v1283
  %v1292 = vadd.f32 %v1276, %v1284
  %v1293 = vadd.f32 %v1277, %v1285
  %v1294 = vadd.f32 %v1278, %v1286
  %v1295 = vadd.f32 %v1279, %v1287
  %v1296 = vmul.f32 %v1212, %v313
  %v1297 = vmul.f32 %v1210, %v317
  %v1298 = vmul.f32 %v1208, %v321
  %v1299 = vmul.f32 %v1214, %v325
  %v1300 = vmul.f32 %v1213, %v313
  %v1301 = vmul.f32 %v1211, %v317
  %v1302 = vmul.f32 %v1209, %v321
  %v1303 = vmul.f32 %v1215, %v325
  %v1304 = vadd.f32 %v1288, %v1296
  %v1305 = vadd.f32 %v1289, %v1297
  %v1306 = vadd.f32 %v1290, %v1298
  %v1307 = vadd.f32 %v1291, %v1299
  %v1308 = vadd.f32 %v1292, %v1300
  %v1309 = vadd.f32 %v1293, %v1301
  %v1310 = vadd.f32 %v1294, %v1302
  %v1311 = vadd.f32 %v1295, %v1303
  %v1312 = vadd.f32 %v1268, %v1304
  %v1313 = vadd.f32 %v1269, %v1305
  %v1314 = vadd.f32 %v1270, %v1306
  %v1315 = vadd.f32 %v1271, %v1307
  %v1316 = vadd.f32 %v1264, %v1308
  %v1317 = vadd.f32 %v1265, %v1309
  %v1318 = vadd.f32 %v1266, %v1310
  %v1319 = vadd.f32 %v1267, %v1311
  %v1320 = vmul.f32 %v1190, %v360
  %v1321 = vmul.f32 %v1188, %v364
  %v1322 = vmul.f32 %v1186, %v368
  %v1323 = vmul.f32 %v1184, %v372
  %v1324 = vmul.f32 %v1191, %v360
  %v1325 = vmul.f32 %v1189, %v364
  %v1326 = vmul.f32 %v1187, %v368
  %v1327 = vmul.f32 %v1185, %v372
  %v1328 = vmul.f32 %v1152, %v452
  %v1329 = vmul.f32 %v1153, %v456
  %v1330 = vmul.f32 %v1154, %v460
  %v1331 = vmul.f32 %v1155, %v464
  %v1332 = vmul.f32 %v1156, %v452
  %v1333 = vmul.f32 %v1157, %v456
  %v1334 = vmul.f32 %v1158, %v460
  %v1335 = vmul.f32 %v1159, %v464
  %v1336 = vadd.f32 %v1320, %v1328
  %v1337 = vadd.f32 %v1321, %v1329
  %v1338 = vadd.f32 %v1322, %v1330
  %v1339 = vadd.f32 %v1323, %v1331
  %v1340 = vadd.f32 %v1324, %v1332
  %v1341 = vadd.f32 %v1325, %v1333
  %v1342 = vadd.f32 %v1326, %v1334
  %v1343 = vadd.f32 %v1327, %v1335
  %v1344 = vmul.f32 %v1212, %v599
  %v1345 = vmul.f32 %v1210, %v603
  %v1346 = vmul.f32 %v1208, %v607
  %v1347 = vmul.f32 %v1214, %v611
  %v1348 = vmul.f32 %v1213, %v599
  %v1349 = vmul.f32 %v1211, %v603
  %v1350 = vmul.f32 %v1209, %v607
  %v1351 = vmul.f32 %v1215, %v611
  %v1352 = vadd.f32 %v1336, %v1344
  %v1353 = vadd.f32 %v1337, %v1345
  %v1354 = vadd.f32 %v1338, %v1346
  %v1355 = vadd.f32 %v1339, %v1347
  %v1356 = vadd.f32 %v1340, %v1348
  %v1357 = vadd.f32 %v1341, %v1349
  %v1358 = vadd.f32 %v1342, %v1350
  %v1359 = vadd.f32 %v1343, %v1351
  %v1360 = vrot.slane %v1352, 1
  %v1361 = vrot.slane %v1353, 1
  %v1362 = vrot.slane %v1354, 1
  %v1363 = vrot.slane %v1355, 1
  %v1364 = vrot.slane %v1356, 1
  %v1365 = vrot.slane %v1357, 1
  %v1366 = vrot.slane %v1358, 1
  %v1367 = vrot.slane %v1359, 1
  %v1368 = vsel %vm887, %v1360, %v1364
  %v1369 = vsel %vm887, %v1361, %v1365
  %v1370 = vsel %vm887, %v1362, %v1366
  %v1371 = vsel %vm887, %v1363, %v1367
  %v1372 = vsel %vm887, %v1364, %v1360
  %v1373 = vsel %vm887, %v1365, %v1361
  %v1374 = vsel %vm887, %v1366, %v1362
  %v1375 = vsel %vm887, %v1367, %v1363
  %v1376 = vadd.f32 %v1312, %v1368
  %v1377 = vadd.f32 %v1313, %v1369
  %v1378 = vadd.f32 %v1314, %v1370
  %v1379 = vadd.f32 %v1315, %v1371
  %v1380 = vadd.f32 %v1316, %v1372
  %v1381 = vadd.f32 %v1317, %v1373
  %v1382 = vadd.f32 %v1318, %v1374
  %v1383 = vadd.f32 %v1319, %v1375
  %v1384 = vadd.f32 %v1376, %v636
  %v1385 = vadd.f32 %v1377, %v640
  %v1386 = vadd.f32 %v1378, %v644
  %v1387 = vadd.f32 %v1379, %v648
  %v1388 = vadd.f32 %v1380, %v636
  %v1389 = vadd.f32 %v1381, %v640
  %v1390 = vadd.f32 %v1382, %v644
  %v1391 = vadd.f32 %v1383, %v648
  %v1392 = vsel %vm28, %v1384, 0.0
  %v1393 = vsel %vm29, %v1385, 0.0
  %v1394 = vsel %vm30, %v1386, 0.0
  %v1395 = vsel %vm31, %v1387, 0.0
  %v1396 = vsel %vm32, %v1388, 0.0
  %v1397 = vsel %vm33, %v1389, 0.0
  %v1398 = vsel %vm34, %v1390, 0.0
  %v1399 = vsel %vm35, %v1391, 0.0
  %v1400 = vadd.f32 %v1160, %v1392
  %v1401 = vadd.f32 %v1161, %v1393
  %v1402 = vadd.f32 %v1162, %v1394
  %v1403 = vadd.f32 %v1163, %v1395
  %v1404 = vadd.f32 %v1164, %v1396
  %v1405 = vadd.f32 %v1165, %v1397
  %v1406 = vadd.f32 %v1166, %v1398
  %v1407 = vadd.f32 %v1167, %v1399
  %v1408 = vmax.f32 %v1392, 0.0
  %v1409 = vmax.f32 %v1393, 0.0
  %v1410 = vmax.f32 %v1394, 0.0
  %v1411 = vmax.f32 %v1395, 0.0
  %v1412 = vmax.f32 %v1396, 0.0
  %v1413 = vmax.f32 %v1397, 0.0
  %v1414 = vmax.f32 %v1398, 0.0
  %v1415 = vmax.f32 %v1399, 0.0
  %v1416 = vadd.f32 %v1400, %v1408
  %v1417 = vadd.f32 %v1401, %v1409
  %v1418 = vadd.f32 %v1402, %v1410
  %v1419 = vadd.f32 %v1403, %v1411
  %v1420 = vadd.f32 %v1404, %v1412
  %v1421 = vadd.f32 %v1405, %v1413
  %v1422 = vadd.f32 %v1406, %v1414
  %v1423 = vadd.f32 %v1407, %v1415
  %1424 = vst [vmem:[%s3] sm:$0xff] %v1416
  %1425 = vst [vmem:[%s3 + $0x8] sm:$0xff] %v1417
  %1426 = vst [vmem:[%s3 + $0x10] sm:$0xff] %v1418
  %1427 = vst [vmem:[%s3 + $0x18] sm:$0xff] %v1419
  %1428 = vst [vmem:[%s3 + $0x20] sm:$0xff] %v1420
  %1429 = vst [vmem:[%s3 + $0x28] sm:$0xff] %v1421
  %1430 = vst [vmem:[%s3 + $0x30] sm:$0xff] %v1422
  %1431 = vst [vmem:[%s3 + $0x38] sm:$0xff] %v1423
  // Predicated region
  $region14: #{model_forward.1} parent=0 // pred_check
    _
  $region15: #{model_forward.1} parent=0 // pred_check_branch
    %1433 = sbr.rel (0) target = $region17
  $region16: #{model_forward.1} parent=0 // pred_region
    _
  $region17: #{model_forward.1} parent=0 // pred_fallthru
    _
  // Predicated region
  $region18: #{model_forward.1} parent=0 // pred_check
    _
  $region19: #{model_forward.1} parent=0 // pred_check_branch
    %1435 = sbr.rel (0) target = $region21
  $region20: #{model_forward.1} parent=0 // pred_region
    _
  $region21: #{model_forward.1} parent=0 // pred_fallthru
    _

</llo_original>
